<compile_context>
chip_gen: v5e
topology: v5e:2x2
jax: 0.10.0
libtpu: 0.0.40
codegen_flags: <defaults>
</compile_context>

<pallas_src>
import functools

import jax
import jax.numpy as jnp
from jax import lax
from jax.experimental import pallas as pl
from jax.experimental.pallas import tpu as pltpu

LANE = 128
DEFAULT_CHUNK = 8


# ------------------------------ Pallas kernel -------------------------------

def _lstm_recurrence_kernel(gx_ref,     # (CHUNK, 4*Hp) precomputed x-gates (+bias), f32
                            whh_ref,    # (Hp, 4*Hp) W_hh^T packed (i,f,o,g), MXU dtype
                            h0c0_ref,   # (2, Hp) initial [h0 ; c0], f32
                            out_ref,    # (CHUNK, Hp) hidden outputs for this chunk
                            hc_ref,     # (2, Hp) final [h_n ; c_n] (written on last step)
                            state_ref,  # VMEM scratch (2, Hp) f32 running [h ; c]
                            *, seq_len):
    b = pl.program_id(0)
    chunk, Hp = out_ref.shape
    mxu_dtype = whh_ref.dtype
    needs_guard = (seq_len % chunk) != 0  # static Python bool

    @pl.when(b == 0)
    def _init():
        state_ref[...] = h0c0_ref[...]

    hc0 = state_ref[...]          # single chunk-boundary load
    h0 = hc0[0:1, :]
    c0 = hc0[1:2, :]

    def step(t, carry):
        h, c = carry
        # Recurrent half only: (1, Hp) @ (Hp, 4*Hp), f32 accumulation on the MXU.
        gates = jnp.dot(h.astype(mxu_dtype), whh_ref[...],
                        preferred_element_type=jnp.float32)
        gates = gates + gx_ref[pl.ds(t, 1), :]

        # Packed gate order (i, f, o, g): one contiguous sigmoid, one tanh.
        sig = jax.nn.sigmoid(gates[:, 0:3 * Hp])
        i_g = sig[:, 0 * Hp:1 * Hp]
        f_g = sig[:, 1 * Hp:2 * Hp]
        o_g = sig[:, 2 * Hp:3 * Hp]
        g_g = jnp.tanh(gates[:, 3 * Hp:4 * Hp])

        c_new = f_g * c + i_g * g_g
        h_new = o_g * jnp.tanh(c_new)

        if needs_guard:  # only traced when the last chunk is partial
            valid = (b * chunk + t) < seq_len
            h_new = jnp.where(valid, h_new, h)
            c_new = jnp.where(valid, c_new, c)

        out_ref[pl.ds(t, 1), :] = h_new.astype(out_ref.dtype)
        return (h_new, c_new)

    h, c = lax.fori_loop(0, chunk, step, (h0, c0), unroll=True)

    # Chunk-boundary handoff of the recurrent state.
    state_ref[0:1, :] = h
    state_ref[1:2, :] = c

    @pl.when(b == pl.num_programs(0) - 1)
    def _finalize():
        hc_ref[...] = state_ref[...]


# --------------------------- parameter preparation ---------------------------

def prepare_encoder_params(params, param_dtype=jnp.float32, lane=LANE):
    """One-time parameter packing (do NOT call per forward).

    * hidden dim H -> Hp (multiple of 128), padded per-gate so every gate slice is
      lane dense; padded weight/bias lanes are zero so padded state stays exactly 0.
    * PyTorch gate order (i, f, g, o) is repacked as (i, f, o, g) so sigmoid gates
      are contiguous inside the kernel.
    * W_ih^T / bias stay outside the kernel (used by the XLA prologue matmul);
      only W_hh^T (Hp, 4*Hp) is resident in VMEM during the recurrence.
    """
    emb = jnp.asarray(params["embedding"], jnp.float32)   # (V, H)
    w_ih = jnp.asarray(params["w_ih"], jnp.float32)       # (4H, H)
    w_hh = jnp.asarray(params["w_hh"], jnp.float32)       # (4H, H)
    b = (jnp.asarray(params["b_ih"], jnp.float32)
         + jnp.asarray(params["b_hh"], jnp.float32))      # (4H,)

    V, H = emb.shape
    Hp = max(lane, ((H + lane - 1) // lane) * lane)

    order = (0, 1, 3, 2)  # PyTorch (i, f, g, o) -> packed (i, f, o, g)
    wih_t = w_ih.T        # (H, 4H)
    whh_t = w_hh.T        # (H, 4H)

    Wih = jnp.zeros((H, 4 * Hp), jnp.float32)
    Whh = jnp.zeros((Hp, 4 * Hp), jnp.float32)
    bias = jnp.zeros((1, 4 * Hp), jnp.float32)
    for k, g in enumerate(order):
        Wih = Wih.at[:, k * Hp:k * Hp + H].set(wih_t[:, g * H:(g + 1) * H])
        Whh = Whh.at[:H, k * Hp:k * Hp + H].set(whh_t[:, g * H:(g + 1) * H])
        bias = bias.at[0, k * Hp:k * Hp + H].set(b[g * H:(g + 1) * H])

    return {
        "H": H,
        "Hp": Hp,
        "V": V,
        "emb": emb.astype(param_dtype),   # used only in the XLA prologue
        "Wih": Wih.astype(param_dtype),   # used only in the XLA prologue
        "Whh": Whh.astype(param_dtype),   # MXU operand, resident in VMEM
        "bias": bias,                     # f32, fused into the prologue
    }


def _vmem_limit_bytes(chunk, Hp):
    # Rough upper bound (f32, double-buffered blocks) + headroom; conservative cap
    # well under v7x's 64 MiB physical VMEM.
    words = (2 * chunk * 4 * Hp       # gx blocks
             + 2 * Hp * 4 * Hp        # Whh
             + 2 * 2 * Hp             # h0c0
             + 2 * chunk * Hp         # out blocks
             + 2 * 2 * Hp             # hc
             + 2 * Hp)                # scratch state
    return int(min(max(words * 4 + (4 << 20), 8 << 20), 48 << 20))


# --------------------------------- wrappers ----------------------------------

def encoder_lstm_encode(tokens, hidden, prep, chunk=DEFAULT_CHUNK):
    """Run T LSTM steps over token ids inside one Pallas kernel launch."""
    H, Hp = prep["H"], prep["Hp"]
    tokens = jnp.asarray(tokens, jnp.int32).reshape(-1)
    T = int(tokens.shape[0])
    num_chunks = pl.cdiv(T, chunk)
    T_pad = num_chunks * chunk

    # --- XLA prologue: embedding lookup + token-dependent gate half, all T at once.
    x = jnp.take(prep["emb"], tokens, axis=0)                       # (T, H)
    gx = jnp.dot(x, prep["Wih"],
                 preferred_element_type=jnp.float32) + prep["bias"]  # (T, 4*Hp) f32
    if T_pad > T:
        gx = jnp.pad(gx, ((0, T_pad - T), (0, 0)))

    h0 = jnp.asarray(hidden[0], jnp.float32).reshape(H)
    c0 = jnp.asarray(hidden[1], jnp.float32).reshape(H)
    h0c0 = jnp.zeros((2, Hp), jnp.float32).at[0, :H].set(h0).at[1, :H].set(c0)

    grid_spec = pltpu.PrefetchScalarGridSpec(
        num_scalar_prefetch=0,
        grid=(num_chunks,),
        in_specs=[
            pl.BlockSpec((chunk, 4 * Hp), lambda b: (b, 0)),   # streamed x-gates
            pl.BlockSpec((Hp, 4 * Hp), lambda b: (0, 0)),      # W_hh^T, resident
            pl.BlockSpec((2, Hp), lambda b: (0, 0)),           # initial [h0; c0]
        ],
        out_specs=[
            pl.BlockSpec((chunk, Hp), lambda b: (b, 0)),       # hidden outputs
            pl.BlockSpec((2, Hp), lambda b: (0, 0)),           # final [h_n; c_n]
        ],
        scratch_shapes=[pltpu.VMEM((2, Hp), jnp.float32)],     # running [h; c]
    )

    outs, hc = pl.pallas_call(
        functools.partial(_lstm_recurrence_kernel, seq_len=T),
        grid_spec=grid_spec,
        out_shape=(
            jax.ShapeDtypeStruct((T_pad, Hp), jnp.float32),
            jax.ShapeDtypeStruct((2, Hp), jnp.float32),
        ),
        compiler_params=pltpu.CompilerParams(
            dimension_semantics=("arbitrary",),                # time is a true recurrence
            vmem_limit_bytes=_vmem_limit_bytes(chunk, Hp)),
    )(gx, prep["Whh"], h0c0)

    outputs = outs[:T, :H].reshape(T, 1, H)
    h_n = hc[0, :H].reshape(1, 1, H)
    c_n = hc[1, :H].reshape(1, 1, H)
    return outputs, (h_n, c_n)


def encoder_lstm_forward(token_idx, hidden, prep):
    """Pallas equivalent of EncoderLSTM.forward: one token -> (output, (h, c))."""
    out, hidden = encoder_lstm_encode(
        jnp.asarray(token_idx, jnp.int32).reshape(1), hidden, prep)
    return out, hidden


# ----------------------------- pure-JAX reference -----------------------------

def _reference_step(token, h, c, params):
    H = params["embedding"].shape[1]
    x = params["embedding"][token].reshape(1, H)
    gates = (x @ params["w_ih"].T + params["b_ih"]
             + h @ params["w_hh"].T + params["b_hh"])
    i_g = jax.nn.sigmoid(gates[:, 0 * H:1 * H])
    f_g = jax.nn.sigmoid(gates[:, 1 * H:2 * H])
    g_g = jnp.tanh(gates[:, 2 * H:3 * H])
    o_g = jax.nn.sigmoid(gates[:, 3 * H:4 * H])
    c_new = f_g * c + i_g * g_g
    h_new = o_g * jnp.tanh(c_new)
    return h_new, c_new


def _reference_encode(tokens, hidden, params):
    H = params["embedding"].shape[1]
    h = jnp.asarray(hidden[0], jnp.float32).reshape(1, H)
    c = jnp.asarray(hidden[1], jnp.float32).reshape(1, H)
    outs = []
    for t in range(tokens.shape[0]):
        h, c = _reference_step(tokens[t], h, c, params)
        outs.append(h)
    outs = jnp.stack(outs, axis=0).reshape(-1, 1, H)
    return outs, (h.reshape(1, 1, H), c.reshape(1, 1, H))


if __name__ == "__main__":
    INPUT_SIZE = 16   # vocab size for nn.Embedding
    HIDDEN = 32
    SEQ = 6           # also exercises the partial-chunk (T % CHUNK != 0) path

    key = jax.random.PRNGKey(0)
    k_emb, k_wih, k_whh, k_bih, k_bhh, k_tok = jax.random.split(key, 6)
    params = {
        "embedding": jax.random.normal(k_emb, (INPUT_SIZE, HIDDEN), jnp.float32) * 0.1,
        "w_ih": jax.random.normal(k_wih, (4 * HIDDEN, HIDDEN), jnp.float32) * 0.1,
        "w_hh": jax.random.normal(k_whh, (4 * HIDDEN, HIDDEN), jnp.float32) * 0.1,
        "b_ih": jax.random.normal(k_bih, (4 * HIDDEN,), jnp.float32) * 0.1,
        "b_hh": jax.random.normal(k_bhh, (4 * HIDDEN,), jnp.float32) * 0.1,
    }

    tokens = jax.random.randint(k_tok, (SEQ,), 0, INPUT_SIZE, dtype=jnp.int32)
    hidden0 = (jnp.zeros((1, 1, HIDDEN), jnp.float32),
               jnp.zeros((1, 1, HIDDEN), jnp.float32))

    # ---- f32 MXU operands: matches the PyTorch-semantics reference tightly ----
    prep_f32 = prepare_encoder_params(params, param_dtype=jnp.float32)

    # Single-token forward (the original module's forward signature).
    tok1 = jnp.array([7], dtype=jnp.int32)
    out1, (h1, c1) = encoder_lstm_forward(tok1, hidden0, prep_f32)
    jax.block_until_ready((out1, h1, c1))
    r_out1, (r_h1, r_c1) = _reference_encode(tok1, hidden0, params)
    assert jnp.allclose(out1, r_out1, atol=1e-5), "single-step output mismatch"
    assert jnp.allclose(h1, r_h1, atol=1e-5), "single-step h_n mismatch"
    assert jnp.allclose(c1, r_c1, atol=1e-5), "single-step c_n mismatch"

    # Full sequence: one kernel launch, recurrence carried in VMEM/vregs.
    outs, (h_n, c_n) = encoder_lstm_encode(tokens, hidden0, prep_f32)
    jax.block_until_ready((outs, h_n, c_n))
    r_outs, (r_h, r_c) = _reference_encode(tokens, hidden0, params)
    assert jnp.allclose(outs, r_outs, atol=1e-5), "sequence outputs mismatch"
    assert jnp.allclose(h_n, r_h, atol=1e-5), "sequence h_n mismatch"
    assert jnp.allclose(c_n, r_c, atol=1e-5), "sequence c_n mismatch"

    # Chunk-boundary-exact sequence (T a multiple of CHUNK) exercises the no-guard path.
    tokens16 = jax.random.randint(jax.random.PRNGKey(1), (16,), 0, INPUT_SIZE, jnp.int32)
    outs16s, (h16s, c16s) = encoder_lstm_encode(tokens16, hidden0, prep_f32)
    jax.block_until_ready((outs16s, h16s, c16s))
    r_outs16, (r_h16, r_c16) = _reference_encode(tokens16, hidden0, params)
    assert jnp.allclose(outs16s, r_outs16, atol=1e-5), "T=16 outputs mismatch"
    assert jnp.allclose(h16s, r_h16, atol=1e-5), "T=16 h_n mismatch"
    assert jnp.allclose(c16s, r_c16, atol=1e-5), "T=16 c_n mismatch"

    # ---- bf16 MXU operands (v6e/v7x weight-bandwidth lever), f32 elementwise ----
    prep_bf16 = prepare_encoder_params(params, param_dtype=jnp.bfloat16)
    outs_b, (h_b, c_b) = encoder_lstm_encode(tokens, hidden0, prep_bf16)
    jax.block_until_ready((outs_b, h_b, c_b))
    assert jnp.allclose(outs_b, r_outs, atol=2e-2), "bf16 outputs mismatch"
    assert jnp.allclose(h_b, r_h, atol=2e-2), "bf16 h_n mismatch"
    assert jnp.allclose(c_b, r_c, atol=2e-2), "bf16 c_n mismatch"

    print("KERNEL_OK")
</pallas_src>

<mosaic_0001>
module attributes {stable_mosaic.version = 11 : i64} {
  func.func @_lstm_recurrence_kernel(%arg0: i32, %arg1: memref<8x512xf32, #tpu.memory_space<vmem>>, %arg2: memref<128x512xf32, #tpu.memory_space<vmem>>, %arg3: memref<2x128xf32, #tpu.memory_space<vmem>>, %arg4: memref<8x128xf32, #tpu.memory_space<vmem>>, %arg5: memref<2x128xf32, #tpu.memory_space<vmem>>, %arg6: memref<2x128xf32, #tpu.memory_space<vmem>>) attributes {dimension_semantics = [#tpu.dimension_semantics<arbitrary>], iteration_bounds = array<i64: 1>, scalar_prefetch = 0 : i64, scratch_operands = 1 : i64, tpu.core_type = #tpu.core_type<tc>, window_params = [{transform_indices = @transform_0, window_bounds = array<i64: 8, 512>}, {pipeline_mode = #tpu.pipeline_mode<synchronous>, transform_indices = @transform_1, window_bounds = array<i64: 128, 512>}, {pipeline_mode = #tpu.pipeline_mode<synchronous>, transform_indices = @transform_2, window_bounds = array<i64: 2, 128>}, {transform_indices = @transform_3, window_bounds = array<i64: 8, 128>}, {pipeline_mode = #tpu.pipeline_mode<synchronous>, transform_indices = @transform_4, window_bounds = array<i64: 2, 128>}]} {
    %c0_i32 = arith.constant 0 : i32
    %0 = arith.cmpi eq, %arg0, %c0_i32 : i32
    %1 = arith.extui %0 : i1 to i32
    %c0_i32_0 = arith.constant 0 : i32
    %2 = arith.cmpi ne, %1, %c0_i32_0 : i32
    scf.if %2 {
      %c0_71 = arith.constant 0 : index
      %c0_72 = arith.constant 0 : index
      %235 = vector.load %arg3[%c0_71, %c0_72] : memref<2x128xf32, #tpu.memory_space<vmem>>, vector<2x128xf32>
      %c0_73 = arith.constant 0 : index
      %c0_74 = arith.constant 0 : index
      %236 = vector.load %arg6[%c0_73, %c0_74] : memref<2x128xf32, #tpu.memory_space<vmem>>, vector<2x128xf32>
      tpu.vector_store %arg6[%c0_73, %c0_74], %235 {strides = array<i32>} : memref<2x128xf32, #tpu.memory_space<vmem>>, vector<2x128xf32>,
    } else {
    }
    %c0 = arith.constant 0 : index
    %c0_1 = arith.constant 0 : index
    %3 = vector.load %arg6[%c0, %c0_1] : memref<2x128xf32, #tpu.memory_space<vmem>>, vector<2x128xf32>
    %4 = vector.extract_strided_slice %3 {offsets = [0, 0], sizes = [1, 128], strides = [1, 1]} : vector<2x128xf32> to vector<1x128xf32>
    %5 = vector.extract_strided_slice %3 {offsets = [1, 0], sizes = [1, 128], strides = [1, 1]} : vector<2x128xf32> to vector<1x128xf32>
    %c0_i32_2 = arith.constant 0 : i32
    %c0_3 = arith.constant 0 : index
    %c0_4 = arith.constant 0 : index
    %6 = vector.load %arg2[%c0_3, %c0_4] : memref<128x512xf32, #tpu.memory_space<vmem>>, vector<128x512xf32>
    %cst = arith.constant dense<0.000000e+00> : vector<1x512xf32>
    %7 = tpu.matmul %4, %6, %cst {dimension_numbers = #tpu.dot_dimension_numbers<[1], [0], [0], [1], [0, 0, 1, 1], [], []>} : vector<1x128xf32>, vector<128x512xf32>, vector<1x512xf32> -> vector<1x512xf32>
    %8 = arith.index_cast %c0_i32_2 : i32 to index
    %c0_5 = arith.constant 0 : index
    %9 = vector.load %arg1[%8, %c0_5] : memref<8x512xf32, #tpu.memory_space<vmem>>, vector<1x512xf32>
    %10 = arith.addf %7, %9 : vector<1x512xf32>
    %11 = vector.extract_strided_slice %10 {offsets = [0, 0], sizes = [1, 384], strides = [1, 1]} : vector<1x512xf32> to vector<1x384xf32>
    %12 = arith.negf %11 : vector<1x384xf32>
    %13 = math.exp %12 : vector<1x384xf32>
    %cst_6 = arith.constant 1.000000e+00 : f32
    %14 = vector.broadcast %cst_6 : f32 to vector<1x384xf32>
    %15 = arith.addf %14, %13 : vector<1x384xf32>
    %16 = arith.divf %14, %15 : vector<1x384xf32>
    %17 = vector.extract_strided_slice %16 {offsets = [0, 0], sizes = [1, 128], strides = [1, 1]} : vector<1x384xf32> to vector<1x128xf32>
    %18 = vector.extract_strided_slice %16 {offsets = [0, 128], sizes = [1, 128], strides = [1, 1]} : vector<1x384xf32> to vector<1x128xf32>
    %19 = vector.extract_strided_slice %16 {offsets = [0, 256], sizes = [1, 128], strides = [1, 1]} : vector<1x384xf32> to vector<1x128xf32>
    %20 = vector.extract_strided_slice %10 {offsets = [0, 384], sizes = [1, 128], strides = [1, 1]} : vector<1x512xf32> to vector<1x128xf32>
    %21 = math.tanh %20 : vector<1x128xf32>
    %22 = arith.mulf %18, %5 : vector<1x128xf32>
    %23 = arith.mulf %17, %21 : vector<1x128xf32>
    %24 = arith.addf %22, %23 : vector<1x128xf32>
    %25 = math.tanh %24 : vector<1x128xf32>
    %26 = arith.mulf %19, %25 : vector<1x128xf32>
    %c8_i32 = arith.constant 8 : i32
    %27 = arith.muli %arg0, %c8_i32 : i32
    %28 = arith.addi %27, %c0_i32_2 : i32
    %c1_i32 = arith.constant 1 : i32
    %29 = arith.cmpi slt, %28, %c1_i32 : i32
    %30 = arith.select %29, %26, %4 : vector<1x128xf32>
    %31 = arith.select %29, %24, %5 : vector<1x128xf32>
    %32 = arith.index_cast %c0_i32_2 : i32 to index
    %c0_7 = arith.constant 0 : index
    %33 = vector.load %arg4[%32, %c0_7] : memref<8x128xf32, #tpu.memory_space<vmem>>, vector<1x128xf32>
    tpu.vector_store %arg4[%32, %c0_7], %30 {strides = array<i32>} : memref<8x128xf32, #tpu.memory_space<vmem>>, vector<1x128xf32>,
    %c1_i32_8 = arith.constant 1 : i32
    %c0_9 = arith.constant 0 : index
    %c0_10 = arith.constant 0 : index
    %34 = vector.load %arg2[%c0_9, %c0_10] : memref<128x512xf32, #tpu.memory_space<vmem>>, vector<128x512xf32>
    %cst_11 = arith.constant dense<0.000000e+00> : vector<1x512xf32>
    %35 = tpu.matmul %30, %34, %cst_11 {dimension_numbers = #tpu.dot_dimension_numbers<[1], [0], [0], [1], [0, 0, 1, 1], [], []>} : vector<1x128xf32>, vector<128x512xf32>, vector<1x512xf32> -> vector<1x512xf32>
    %36 = arith.index_cast %c1_i32_8 : i32 to index
    %c0_12 = arith.constant 0 : index
    %37 = vector.load %arg1[%36, %c0_12] : memref<8x512xf32, #tpu.memory_space<vmem>>, vector<1x512xf32>
    %38 = arith.addf %35, %37 : vector<1x512xf32>
    %39 = vector.extract_strided_slice %38 {offsets = [0, 0], sizes = [1, 384], strides = [1, 1]} : vector<1x512xf32> to vector<1x384xf32>
    %40 = arith.negf %39 : vector<1x384xf32>
    %41 = math.exp %40 : vector<1x384xf32>
    %cst_13 = arith.constant 1.000000e+00 : f32
    %42 = vector.broadcast %cst_13 : f32 to vector<1x384xf32>
    %43 = arith.addf %42, %41 : vector<1x384xf32>
    %44 = arith.divf %42, %43 : vector<1x384xf32>
    %45 = vector.extract_strided_slice %44 {offsets = [0, 0], sizes = [1, 128], strides = [1, 1]} : vector<1x384xf32> to vector<1x128xf32>
    %46 = vector.extract_strided_slice %44 {offsets = [0, 128], sizes = [1, 128], strides = [1, 1]} : vector<1x384xf32> to vector<1x128xf32>
    %47 = vector.extract_strided_slice %44 {offsets = [0, 256], sizes = [1, 128], strides = [1, 1]} : vector<1x384xf32> to vector<1x128xf32>
    %48 = vector.extract_strided_slice %38 {offsets = [0, 384], sizes = [1, 128], strides = [1, 1]} : vector<1x512xf32> to vector<1x128xf32>
    %49 = math.tanh %48 : vector<1x128xf32>
    %50 = arith.mulf %46, %31 : vector<1x128xf32>
    %51 = arith.mulf %45, %49 : vector<1x128xf32>
    %52 = arith.addf %50, %51 : vector<1x128xf32>
    %53 = math.tanh %52 : vector<1x128xf32>
    %54 = arith.mulf %47, %53 : vector<1x128xf32>
    %c8_i32_14 = arith.constant 8 : i32
    %55 = arith.muli %arg0, %c8_i32_14 : i32
    %56 = arith.addi %55, %c1_i32_8 : i32
    %c1_i32_15 = arith.constant 1 : i32
    %57 = arith.cmpi slt, %56, %c1_i32_15 : i32
    %58 = arith.select %57, %54, %30 : vector<1x128xf32>
    %59 = arith.select %57, %52, %31 : vector<1x128xf32>
    %60 = arith.index_cast %c1_i32_8 : i32 to index
    %c0_16 = arith.constant 0 : index
    %61 = vector.load %arg4[%60, %c0_16] : memref<8x128xf32, #tpu.memory_space<vmem>>, vector<1x128xf32>
    tpu.vector_store %arg4[%60, %c0_16], %58 {strides = array<i32>} : memref<8x128xf32, #tpu.memory_space<vmem>>, vector<1x128xf32>,
    %c2_i32 = arith.constant 2 : i32
    %c0_17 = arith.constant 0 : index
    %c0_18 = arith.constant 0 : index
    %62 = vector.load %arg2[%c0_17, %c0_18] : memref<128x512xf32, #tpu.memory_space<vmem>>, vector<128x512xf32>
    %cst_19 = arith.constant dense<0.000000e+00> : vector<1x512xf32>
    %63 = tpu.matmul %58, %62, %cst_19 {dimension_numbers = #tpu.dot_dimension_numbers<[1], [0], [0], [1], [0, 0, 1, 1], [], []>} : vector<1x128xf32>, vector<128x512xf32>, vector<1x512xf32> -> vector<1x512xf32>
    %64 = arith.index_cast %c2_i32 : i32 to index
    %c0_20 = arith.constant 0 : index
    %65 = vector.load %arg1[%64, %c0_20] : memref<8x512xf32, #tpu.memory_space<vmem>>, vector<1x512xf32>
    %66 = arith.addf %63, %65 : vector<1x512xf32>
    %67 = vector.extract_strided_slice %66 {offsets = [0, 0], sizes = [1, 384], strides = [1, 1]} : vector<1x512xf32> to vector<1x384xf32>
    %68 = arith.negf %67 : vector<1x384xf32>
    %69 = math.exp %68 : vector<1x384xf32>
    %cst_21 = arith.constant 1.000000e+00 : f32
    %70 = vector.broadcast %cst_21 : f32 to vector<1x384xf32>
    %71 = arith.addf %70, %69 : vector<1x384xf32>
    %72 = arith.divf %70, %71 : vector<1x384xf32>
    %73 = vector.extract_strided_slice %72 {offsets = [0, 0], sizes = [1, 128], strides = [1, 1]} : vector<1x384xf32> to vector<1x128xf32>
    %74 = vector.extract_strided_slice %72 {offsets = [0, 128], sizes = [1, 128], strides = [1, 1]} : vector<1x384xf32> to vector<1x128xf32>
    %75 = vector.extract_strided_slice %72 {offsets = [0, 256], sizes = [1, 128], strides = [1, 1]} : vector<1x384xf32> to vector<1x128xf32>
    %76 = vector.extract_strided_slice %66 {offsets = [0, 384], sizes = [1, 128], strides = [1, 1]} : vector<1x512xf32> to vector<1x128xf32>
    %77 = math.tanh %76 : vector<1x128xf32>
    %78 = arith.mulf %74, %59 : vector<1x128xf32>
    %79 = arith.mulf %73, %77 : vector<1x128xf32>
    %80 = arith.addf %78, %79 : vector<1x128xf32>
    %81 = math.tanh %80 : vector<1x128xf32>
    %82 = arith.mulf %75, %81 : vector<1x128xf32>
    %c8_i32_22 = arith.constant 8 : i32
    %83 = arith.muli %arg0, %c8_i32_22 : i32
    %84 = arith.addi %83, %c2_i32 : i32
    %c1_i32_23 = arith.constant 1 : i32
    %85 = arith.cmpi slt, %84, %c1_i32_23 : i32
    %86 = arith.select %85, %82, %58 : vector<1x128xf32>
    %87 = arith.select %85, %80, %59 : vector<1x128xf32>
    %88 = arith.index_cast %c2_i32 : i32 to index
    %c0_24 = arith.constant 0 : index
    %89 = vector.load %arg4[%88, %c0_24] : memref<8x128xf32, #tpu.memory_space<vmem>>, vector<1x128xf32>
    tpu.vector_store %arg4[%88, %c0_24], %86 {strides = array<i32>} : memref<8x128xf32, #tpu.memory_space<vmem>>, vector<1x128xf32>,
    %c3_i32 = arith.constant 3 : i32
    %c0_25 = arith.constant 0 : index
    %c0_26 = arith.constant 0 : index
    %90 = vector.load %arg2[%c0_25, %c0_26] : memref<128x512xf32, #tpu.memory_space<vmem>>, vector<128x512xf32>
    %cst_27 = arith.constant dense<0.000000e+00> : vector<1x512xf32>
    %91 = tpu.matmul %86, %90, %cst_27 {dimension_numbers = #tpu.dot_dimension_numbers<[1], [0], [0], [1], [0, 0, 1, 1], [], []>} : vector<1x128xf32>, vector<128x512xf32>, vector<1x512xf32> -> vector<1x512xf32>
    %92 = arith.index_cast %c3_i32 : i32 to index
    %c0_28 = arith.constant 0 : index
    %93 = vector.load %arg1[%92, %c0_28] : memref<8x512xf32, #tpu.memory_space<vmem>>, vector<1x512xf32>
    %94 = arith.addf %91, %93 : vector<1x512xf32>
    %95 = vector.extract_strided_slice %94 {offsets = [0, 0], sizes = [1, 384], strides = [1, 1]} : vector<1x512xf32> to vector<1x384xf32>
    %96 = arith.negf %95 : vector<1x384xf32>
    %97 = math.exp %96 : vector<1x384xf32>
    %cst_29 = arith.constant 1.000000e+00 : f32
    %98 = vector.broadcast %cst_29 : f32 to vector<1x384xf32>
    %99 = arith.addf %98, %97 : vector<1x384xf32>
    %100 = arith.divf %98, %99 : vector<1x384xf32>
    %101 = vector.extract_strided_slice %100 {offsets = [0, 0], sizes = [1, 128], strides = [1, 1]} : vector<1x384xf32> to vector<1x128xf32>
    %102 = vector.extract_strided_slice %100 {offsets = [0, 128], sizes = [1, 128], strides = [1, 1]} : vector<1x384xf32> to vector<1x128xf32>
    %103 = vector.extract_strided_slice %100 {offsets = [0, 256], sizes = [1, 128], strides = [1, 1]} : vector<1x384xf32> to vector<1x128xf32>
    %104 = vector.extract_strided_slice %94 {offsets = [0, 384], sizes = [1, 128], strides = [1, 1]} : vector<1x512xf32> to vector<1x128xf32>
    %105 = math.tanh %104 : vector<1x128xf32>
    %106 = arith.mulf %102, %87 : vector<1x128xf32>
    %107 = arith.mulf %101, %105 : vector<1x128xf32>
    %108 = arith.addf %106, %107 : vector<1x128xf32>
    %109 = math.tanh %108 : vector<1x128xf32>
    %110 = arith.mulf %103, %109 : vector<1x128xf32>
    %c8_i32_30 = arith.constant 8 : i32
    %111 = arith.muli %arg0, %c8_i32_30 : i32
    %112 = arith.addi %111, %c3_i32 : i32
    %c1_i32_31 = arith.constant 1 : i32
    %113 = arith.cmpi slt, %112, %c1_i32_31 : i32
    %114 = arith.select %113, %110, %86 : vector<1x128xf32>
    %115 = arith.select %113, %108, %87 : vector<1x128xf32>
    %116 = arith.index_cast %c3_i32 : i32 to index
    %c0_32 = arith.constant 0 : index
    %117 = vector.load %arg4[%116, %c0_32] : memref<8x128xf32, #tpu.memory_space<vmem>>, vector<1x128xf32>
    tpu.vector_store %arg4[%116, %c0_32], %114 {strides = array<i32>} : memref<8x128xf32, #tpu.memory_space<vmem>>, vector<1x128xf32>,
    %c4_i32 = arith.constant 4 : i32
    %c0_33 = arith.constant 0 : index
    %c0_34 = arith.constant 0 : index
    %118 = vector.load %arg2[%c0_33, %c0_34] : memref<128x512xf32, #tpu.memory_space<vmem>>, vector<128x512xf32>
    %cst_35 = arith.constant dense<0.000000e+00> : vector<1x512xf32>
    %119 = tpu.matmul %114, %118, %cst_35 {dimension_numbers = #tpu.dot_dimension_numbers<[1], [0], [0], [1], [0, 0, 1, 1], [], []>} : vector<1x128xf32>, vector<128x512xf32>, vector<1x512xf32> -> vector<1x512xf32>
    %120 = arith.index_cast %c4_i32 : i32 to index
    %c0_36 = arith.constant 0 : index
    %121 = vector.load %arg1[%120, %c0_36] : memref<8x512xf32, #tpu.memory_space<vmem>>, vector<1x512xf32>
    %122 = arith.addf %119, %121 : vector<1x512xf32>
    %123 = vector.extract_strided_slice %122 {offsets = [0, 0], sizes = [1, 384], strides = [1, 1]} : vector<1x512xf32> to vector<1x384xf32>
    %124 = arith.negf %123 : vector<1x384xf32>
    %125 = math.exp %124 : vector<1x384xf32>
    %cst_37 = arith.constant 1.000000e+00 : f32
    %126 = vector.broadcast %cst_37 : f32 to vector<1x384xf32>
    %127 = arith.addf %126, %125 : vector<1x384xf32>
    %128 = arith.divf %126, %127 : vector<1x384xf32>
    %129 = vector.extract_strided_slice %128 {offsets = [0, 0], sizes = [1, 128], strides = [1, 1]} : vector<1x384xf32> to vector<1x128xf32>
    %130 = vector.extract_strided_slice %128 {offsets = [0, 128], sizes = [1, 128], strides = [1, 1]} : vector<1x384xf32> to vector<1x128xf32>
    %131 = vector.extract_strided_slice %128 {offsets = [0, 256], sizes = [1, 128], strides = [1, 1]} : vector<1x384xf32> to vector<1x128xf32>
    %132 = vector.extract_strided_slice %122 {offsets = [0, 384], sizes = [1, 128], strides = [1, 1]} : vector<1x512xf32> to vector<1x128xf32>
    %133 = math.tanh %132 : vector<1x128xf32>
    %134 = arith.mulf %130, %115 : vector<1x128xf32>
    %135 = arith.mulf %129, %133 : vector<1x128xf32>
    %136 = arith.addf %134, %135 : vector<1x128xf32>
    %137 = math.tanh %136 : vector<1x128xf32>
    %138 = arith.mulf %131, %137 : vector<1x128xf32>
    %c8_i32_38 = arith.constant 8 : i32
    %139 = arith.muli %arg0, %c8_i32_38 : i32
    %140 = arith.addi %139, %c4_i32 : i32
    %c1_i32_39 = arith.constant 1 : i32
    %141 = arith.cmpi slt, %140, %c1_i32_39 : i32
    %142 = arith.select %141, %138, %114 : vector<1x128xf32>
    %143 = arith.select %141, %136, %115 : vector<1x128xf32>
    %144 = arith.index_cast %c4_i32 : i32 to index
    %c0_40 = arith.constant 0 : index
    %145 = vector.load %arg4[%144, %c0_40] : memref<8x128xf32, #tpu.memory_space<vmem>>, vector<1x128xf32>
    tpu.vector_store %arg4[%144, %c0_40], %142 {strides = array<i32>} : memref<8x128xf32, #tpu.memory_space<vmem>>, vector<1x128xf32>,
    %c5_i32 = arith.constant 5 : i32
    %c0_41 = arith.constant 0 : index
    %c0_42 = arith.constant 0 : index
    %146 = vector.load %arg2[%c0_41, %c0_42] : memref<128x512xf32, #tpu.memory_space<vmem>>, vector<128x512xf32>
    %cst_43 = arith.constant dense<0.000000e+00> : vector<1x512xf32>
    %147 = tpu.matmul %142, %146, %cst_43 {dimension_numbers = #tpu.dot_dimension_numbers<[1], [0], [0], [1], [0, 0, 1, 1], [], []>} : vector<1x128xf32>, vector<128x512xf32>, vector<1x512xf32> -> vector<1x512xf32>
    %148 = arith.index_cast %c5_i32 : i32 to index
    %c0_44 = arith.constant 0 : index
    %149 = vector.load %arg1[%148, %c0_44] : memref<8x512xf32, #tpu.memory_space<vmem>>, vector<1x512xf32>
    %150 = arith.addf %147, %149 : vector<1x512xf32>
    %151 = vector.extract_strided_slice %150 {offsets = [0, 0], sizes = [1, 384], strides = [1, 1]} : vector<1x512xf32> to vector<1x384xf32>
    %152 = arith.negf %151 : vector<1x384xf32>
    %153 = math.exp %152 : vector<1x384xf32>
    %cst_45 = arith.constant 1.000000e+00 : f32
    %154 = vector.broadcast %cst_45 : f32 to vector<1x384xf32>
    %155 = arith.addf %154, %153 : vector<1x384xf32>
    %156 = arith.divf %154, %155 : vector<1x384xf32>
    %157 = vector.extract_strided_slice %156 {offsets = [0, 0], sizes = [1, 128], strides = [1, 1]} : vector<1x384xf32> to vector<1x128xf32>
    %158 = vector.extract_strided_slice %156 {offsets = [0, 128], sizes = [1, 128], strides = [1, 1]} : vector<1x384xf32> to vector<1x128xf32>
    %159 = vector.extract_strided_slice %156 {offsets = [0, 256], sizes = [1, 128], strides = [1, 1]} : vector<1x384xf32> to vector<1x128xf32>
    %160 = vector.extract_strided_slice %150 {offsets = [0, 384], sizes = [1, 128], strides = [1, 1]} : vector<1x512xf32> to vector<1x128xf32>
    %161 = math.tanh %160 : vector<1x128xf32>
    %162 = arith.mulf %158, %143 : vector<1x128xf32>
    %163 = arith.mulf %157, %161 : vector<1x128xf32>
    %164 = arith.addf %162, %163 : vector<1x128xf32>
    %165 = math.tanh %164 : vector<1x128xf32>
    %166 = arith.mulf %159, %165 : vector<1x128xf32>
    %c8_i32_46 = arith.constant 8 : i32
    %167 = arith.muli %arg0, %c8_i32_46 : i32
    %168 = arith.addi %167, %c5_i32 : i32
    %c1_i32_47 = arith.constant 1 : i32
    %169 = arith.cmpi slt, %168, %c1_i32_47 : i32
    %170 = arith.select %169, %166, %142 : vector<1x128xf32>
    %171 = arith.select %169, %164, %143 : vector<1x128xf32>
    %172 = arith.index_cast %c5_i32 : i32 to index
    %c0_48 = arith.constant 0 : index
    %173 = vector.load %arg4[%172, %c0_48] : memref<8x128xf32, #tpu.memory_space<vmem>>, vector<1x128xf32>
    tpu.vector_store %arg4[%172, %c0_48], %170 {strides = array<i32>} : memref<8x128xf32, #tpu.memory_space<vmem>>, vector<1x128xf32>,
    %c6_i32 = arith.constant 6 : i32
    %c0_49 = arith.constant 0 : index
    %c0_50 = arith.constant 0 : index
    %174 = vector.load %arg2[%c0_49, %c0_50] : memref<128x512xf32, #tpu.memory_space<vmem>>, vector<128x512xf32>
    %cst_51 = arith.constant dense<0.000000e+00> : vector<1x512xf32>
    %175 = tpu.matmul %170, %174, %cst_51 {dimension_numbers = #tpu.dot_dimension_numbers<[1], [0], [0], [1], [0, 0, 1, 1], [], []>} : vector<1x128xf32>, vector<128x512xf32>, vector<1x512xf32> -> vector<1x512xf32>
    %176 = arith.index_cast %c6_i32 : i32 to index
    %c0_52 = arith.constant 0 : index
    %177 = vector.load %arg1[%176, %c0_52] : memref<8x512xf32, #tpu.memory_space<vmem>>, vector<1x512xf32>
    %178 = arith.addf %175, %177 : vector<1x512xf32>
    %179 = vector.extract_strided_slice %178 {offsets = [0, 0], sizes = [1, 384], strides = [1, 1]} : vector<1x512xf32> to vector<1x384xf32>
    %180 = arith.negf %179 : vector<1x384xf32>
    %181 = math.exp %180 : vector<1x384xf32>
    %cst_53 = arith.constant 1.000000e+00 : f32
    %182 = vector.broadcast %cst_53 : f32 to vector<1x384xf32>
    %183 = arith.addf %182, %181 : vector<1x384xf32>
    %184 = arith.divf %182, %183 : vector<1x384xf32>
    %185 = vector.extract_strided_slice %184 {offsets = [0, 0], sizes = [1, 128], strides = [1, 1]} : vector<1x384xf32> to vector<1x128xf32>
    %186 = vector.extract_strided_slice %184 {offsets = [0, 128], sizes = [1, 128], strides = [1, 1]} : vector<1x384xf32> to vector<1x128xf32>
    %187 = vector.extract_strided_slice %184 {offsets = [0, 256], sizes = [1, 128], strides = [1, 1]} : vector<1x384xf32> to vector<1x128xf32>
    %188 = vector.extract_strided_slice %178 {offsets = [0, 384], sizes = [1, 128], strides = [1, 1]} : vector<1x512xf32> to vector<1x128xf32>
    %189 = math.tanh %188 : vector<1x128xf32>
    %190 = arith.mulf %186, %171 : vector<1x128xf32>
    %191 = arith.mulf %185, %189 : vector<1x128xf32>
    %192 = arith.addf %190, %191 : vector<1x128xf32>
    %193 = math.tanh %192 : vector<1x128xf32>
    %194 = arith.mulf %187, %193 : vector<1x128xf32>
    %c8_i32_54 = arith.constant 8 : i32
    %195 = arith.muli %arg0, %c8_i32_54 : i32
    %196 = arith.addi %195, %c6_i32 : i32
    %c1_i32_55 = arith.constant 1 : i32
    %197 = arith.cmpi slt, %196, %c1_i32_55 : i32
    %198 = arith.select %197, %194, %170 : vector<1x128xf32>
    %199 = arith.select %197, %192, %171 : vector<1x128xf32>
    %200 = arith.index_cast %c6_i32 : i32 to index
    %c0_56 = arith.constant 0 : index
    %201 = vector.load %arg4[%200, %c0_56] : memref<8x128xf32, #tpu.memory_space<vmem>>, vector<1x128xf32>
    tpu.vector_store %arg4[%200, %c0_56], %198 {strides = array<i32>} : memref<8x128xf32, #tpu.memory_space<vmem>>, vector<1x128xf32>,
    %c7_i32 = arith.constant 7 : i32
    %c0_57 = arith.constant 0 : index
    %c0_58 = arith.constant 0 : index
    %202 = vector.load %arg2[%c0_57, %c0_58] : memref<128x512xf32, #tpu.memory_space<vmem>>, vector<128x512xf32>
    %cst_59 = arith.constant dense<0.000000e+00> : vector<1x512xf32>
    %203 = tpu.matmul %198, %202, %cst_59 {dimension_numbers = #tpu.dot_dimension_numbers<[1], [0], [0], [1], [0, 0, 1, 1], [], []>} : vector<1x128xf32>, vector<128x512xf32>, vector<1x512xf32> -> vector<1x512xf32>
    %204 = arith.index_cast %c7_i32 : i32 to index
    %c0_60 = arith.constant 0 : index
    %205 = vector.load %arg1[%204, %c0_60] : memref<8x512xf32, #tpu.memory_space<vmem>>, vector<1x512xf32>
    %206 = arith.addf %203, %205 : vector<1x512xf32>
    %207 = vector.extract_strided_slice %206 {offsets = [0, 0], sizes = [1, 384], strides = [1, 1]} : vector<1x512xf32> to vector<1x384xf32>
    %208 = arith.negf %207 : vector<1x384xf32>
    %209 = math.exp %208 : vector<1x384xf32>
    %cst_61 = arith.constant 1.000000e+00 : f32
    %210 = vector.broadcast %cst_61 : f32 to vector<1x384xf32>
    %211 = arith.addf %210, %209 : vector<1x384xf32>
    %212 = arith.divf %210, %211 : vector<1x384xf32>
    %213 = vector.extract_strided_slice %212 {offsets = [0, 0], sizes = [1, 128], strides = [1, 1]} : vector<1x384xf32> to vector<1x128xf32>
    %214 = vector.extract_strided_slice %212 {offsets = [0, 128], sizes = [1, 128], strides = [1, 1]} : vector<1x384xf32> to vector<1x128xf32>
    %215 = vector.extract_strided_slice %212 {offsets = [0, 256], sizes = [1, 128], strides = [1, 1]} : vector<1x384xf32> to vector<1x128xf32>
    %216 = vector.extract_strided_slice %206 {offsets = [0, 384], sizes = [1, 128], strides = [1, 1]} : vector<1x512xf32> to vector<1x128xf32>
    %217 = math.tanh %216 : vector<1x128xf32>
    %218 = arith.mulf %214, %199 : vector<1x128xf32>
    %219 = arith.mulf %213, %217 : vector<1x128xf32>
    %220 = arith.addf %218, %219 : vector<1x128xf32>
    %221 = math.tanh %220 : vector<1x128xf32>
    %222 = arith.mulf %215, %221 : vector<1x128xf32>
    %c8_i32_62 = arith.constant 8 : i32
    %223 = arith.muli %arg0, %c8_i32_62 : i32
    %224 = arith.addi %223, %c7_i32 : i32
    %c1_i32_63 = arith.constant 1 : i32
    %225 = arith.cmpi slt, %224, %c1_i32_63 : i32
    %226 = arith.select %225, %222, %198 : vector<1x128xf32>
    %227 = arith.select %225, %220, %199 : vector<1x128xf32>
    %228 = arith.index_cast %c7_i32 : i32 to index
    %c0_64 = arith.constant 0 : index
    %229 = vector.load %arg4[%228, %c0_64] : memref<8x128xf32, #tpu.memory_space<vmem>>, vector<1x128xf32>
    tpu.vector_store %arg4[%228, %c0_64], %226 {strides = array<i32>} : memref<8x128xf32, #tpu.memory_space<vmem>>, vector<1x128xf32>,
    %c8_i32_65 = arith.constant 8 : i32
    %c0_66 = arith.constant 0 : index
    %c0_67 = arith.constant 0 : index
    %230 = vector.load %arg6[%c0_66, %c0_67] : memref<2x128xf32, #tpu.memory_space<vmem>>, vector<1x128xf32>
    tpu.vector_store %arg6[%c0_66, %c0_67], %226 {strides = array<i32>} : memref<2x128xf32, #tpu.memory_space<vmem>>, vector<1x128xf32>,
    %c1 = arith.constant 1 : index
    %c0_68 = arith.constant 0 : index
    %231 = vector.load %arg6[%c1, %c0_68] : memref<2x128xf32, #tpu.memory_space<vmem>>, vector<1x128xf32>
    tpu.vector_store %arg6[%c1, %c0_68], %227 {strides = array<i32>} : memref<2x128xf32, #tpu.memory_space<vmem>>, vector<1x128xf32>,
    %c0_i32_69 = arith.constant 0 : i32
    %232 = arith.cmpi eq, %arg0, %c0_i32_69 : i32
    %233 = arith.extui %232 : i1 to i32
    %c0_i32_70 = arith.constant 0 : i32
    %234 = arith.cmpi ne, %233, %c0_i32_70 : i32
    scf.if %234 {
      %c0_71 = arith.constant 0 : index
      %c0_72 = arith.constant 0 : index
      %235 = vector.load %arg6[%c0_71, %c0_72] : memref<2x128xf32, #tpu.memory_space<vmem>>, vector<2x128xf32>
      %c0_73 = arith.constant 0 : index
      %c0_74 = arith.constant 0 : index
      %236 = vector.load %arg5[%c0_73, %c0_74] : memref<2x128xf32, #tpu.memory_space<vmem>>, vector<2x128xf32>
      tpu.vector_store %arg5[%c0_73, %c0_74], %235 {strides = array<i32>} : memref<2x128xf32, #tpu.memory_space<vmem>>, vector<2x128xf32>,
    } else {
    }
    return
  }
  func.func @transform_0(%arg0: i32) -> (i32, i32) {
    %c0_i32 = arith.constant 0 : i32
    %c0_i32_0 = arith.constant 0 : i32
    return %arg0, %c0_i32 : i32, i32
  }
  func.func @transform_1(%arg0: i32) -> (i32, i32) {
    %c0_i32 = arith.constant 0 : i32
    %c0_i32_0 = arith.constant 0 : i32
    %c0_i32_1 = arith.constant 0 : i32
    return %c0_i32, %c0_i32_0 : i32, i32
  }
  func.func @transform_2(%arg0: i32) -> (i32, i32) {
    %c0_i32 = arith.constant 0 : i32
    %c0_i32_0 = arith.constant 0 : i32
    %c0_i32_1 = arith.constant 0 : i32
    return %c0_i32, %c0_i32_0 : i32, i32
  }
  func.func @transform_3(%arg0: i32) -> (i32, i32) {
    %c0_i32 = arith.constant 0 : i32
    %c0_i32_0 = arith.constant 0 : i32
    return %arg0, %c0_i32 : i32, i32
  }
  func.func @transform_4(%arg0: i32) -> (i32, i32) {
    %c0_i32 = arith.constant 0 : i32
    %c0_i32_0 = arith.constant 0 : i32
    %c0_i32_1 = arith.constant 0 : i32
    return %c0_i32, %c0_i32_0 : i32, i32
  }
}

</mosaic_0001>

<llo_original>
// kernel: tpu_custom_call.1
$region0: #{tpu_custom_call.1}
  #allocation0 [shape = 'u32[]', space=smem, size = 0x4, offset = 0x4, fixed_abs, tag = 'smem constant byte address 0x4 - core index']
  #allocation1 [shape = 'u32[72,128]{1,0:T(1,128)}', space=vmem, size = 0x9000, scoped, tag = 'internal scratch']
  #allocation2 [shape = 'f32[2,128]{1,0:T(2,128)}', space=vmem, size = 0x400, scoped, tag = 'scratch operand']
  %s0 = inlined_call_operand.hbm [shape: f32[8,512], index: 0, kind: input, shape index: {}]
  %s1 = inlined_call_operand.hbm [shape: f32[128,512], index: 1, kind: input, shape index: {}]
  %s2 = inlined_call_operand.hbm [shape: f32[2,128], index: 2, kind: input, shape index: {}]
  %s3 = inlined_call_operand.hbm [shape: f32[8,128], index: 3, kind: output, shape index: {0}]
  %s4 = inlined_call_operand.hbm [shape: f32[2,128], index: 4, kind: output, shape index: {1}]
  %5 = xla_tuple %s3, %s4
  %s6 = sld [smem:[#allocation0]]
  $region50: #{tpu_custom_call.1} parent=0
    _
  %s8 = ssub.s32 1, %s6
  %s9 = scalar_select 0, %s8, %s6
  $region1: #{tpu_custom_call.1} parent=0
    #allocation3 [shape = 'u8[16384]{0}', space=vmem, size = 0x4000, scoped, tag = 'input window, operand 0, single buffered']
    #allocation4 [shape = 's32[1]{0}', space=sflag, size = 0x4, scoped, tag = 'scoped memory for tpu_custom_call.1']
    #allocation5 [shape = 's32[1]{0}', space=sflag, size = 0x4, scoped, tag = 'scoped memory for tpu_custom_call.1']
    #allocation6 [shape = 'u8[262144]{0}', space=vmem, size = 0x40000, scoped, tag = 'input window, operand 1, single buffered']
    #allocation7 [shape = 's32[1]{0}', space=sflag, size = 0x4, scoped, tag = 'scoped memory for tpu_custom_call.1']
    #allocation8 [shape = 'u8[1024]{0}', space=vmem, size = 0x400, scoped, tag = 'input window, operand 2, single buffered']
    #allocation9 [shape = 'u8[4096]{0}', space=vmem, size = 0x1000, scoped, tag = 'output window, operand 0, single buffered']
    #allocation10 [shape = 'u8[1024]{0}', space=vmem, size = 0x400, scoped, tag = 'output window, operand 1, single buffered']
    #allocation11 [shape = 's32[1]{0}', space=sflag, size = 0x4, scoped, tag = 'scoped memory for tpu_custom_call.1']
    %10 = vsyncpa [#allocation4], 0
    %11 = vsyncpa [#allocation7], 0
    %12 = vsyncpa [#allocation5], 0
    %13 = vsyncpa [#allocation11], 0
    // Predicated region
    $region2: #{tpu_custom_call.1} parent=1 // pred_check
      _
    $region3: #{tpu_custom_call.1} parent=1 // pred_check_branch
      %15 = sbr.rel (0) target = $region5
    $region4: #{tpu_custom_call.1} parent=1 // pred_region
      %17 = vsyncadd [#allocation4], 0
      %s19 = sshll.u32 %s0, 4
      %s20 = int_to_ptr.hbm [resolvable:$true] %s19
      %s21 = sshll.u32 [#allocation3], 4
      %s22 = int_to_ptr.vmem [resolvable:$true] %s21
      %24 = dma.hbm_to_vmem [thread:$0]  %s20, 512, %s22, [#allocation4]
    $region5: #{tpu_custom_call.1} parent=1 // pred_fallthru
      _
    // Predicated region
    $region6: #{tpu_custom_call.1} parent=1 // pred_check
      _
    $region7: #{tpu_custom_call.1} parent=1 // pred_check_branch
      %26 = sbr.rel (0) target = $region9
    $region8: #{tpu_custom_call.1} parent=1 // pred_region
      %28 = vsyncadd [#allocation7], 0
      %s29 = sshll.u32 %s1, 4
      %s30 = int_to_ptr.hbm [resolvable:$true] %s29
      %s31 = sshll.u32 [#allocation6], 4
      %s32 = int_to_ptr.vmem [resolvable:$true] %s31
      %37 = dma.hbm_to_vmem [thread:$0]  %s30, 8192, %s32, [#allocation7], 512, 512, 32
    $region9: #{tpu_custom_call.1} parent=1 // pred_fallthru
      _
    // Predicated region
    $region10: #{tpu_custom_call.1} parent=1 // pred_check
      _
    $region11: #{tpu_custom_call.1} parent=1 // pred_check_branch
      %39 = sbr.rel (0) target = $region13
    $region12: #{tpu_custom_call.1} parent=1 // pred_region
      %41 = vsyncadd [#allocation7], 0
      %s43 = sshll.u32 %s2, 4
      %s44 = int_to_ptr.hbm [resolvable:$true] %s43
      %s45 = sshll.u32 [#allocation8], 4
      %s46 = int_to_ptr.vmem [resolvable:$true] %s45
      %48 = dma.hbm_to_vmem [thread:$0]  %s44, 32, %s46, [#allocation7]
    $region13: #{tpu_custom_call.1} parent=1 // pred_fallthru
      _
    // Predicated region
    $region14: #{tpu_custom_call.1} parent=1 // pred_check
      _
    $region15: #{tpu_custom_call.1} parent=1 // pred_check_branch
      %50 = sbr.rel (0) target = $region17
    $region16: #{tpu_custom_call.1} parent=1 // pred_region
      %52 = dma.done [#allocation4], 512
    $region17: #{tpu_custom_call.1} parent=1 // pred_fallthru
      _
    // Predicated region
    $region18: #{tpu_custom_call.1} parent=1 // pred_check
      _
    $region19: #{tpu_custom_call.1} parent=1 // pred_check_branch
      %54 = sbr.rel (0) target = $region21
    $region20: #{tpu_custom_call.1} parent=1 // pred_region
      %56 = dma.done [#allocation7], 8192
    $region21: #{tpu_custom_call.1} parent=1 // pred_fallthru
      _
    // Predicated region
    $region22: #{tpu_custom_call.1} parent=1 // pred_check
      _
    $region23: #{tpu_custom_call.1} parent=1 // pred_check_branch
      %58 = sbr.rel (0) target = $region25
    $region24: #{tpu_custom_call.1} parent=1 // pred_region
      %60 = dma.done [#allocation7], 32
    $region25: #{tpu_custom_call.1} parent=1 // pred_fallthru
      _
    %p61 = scmp.eq.s32.totalorder 0, 0
    // Predicated region
    $region26: #{tpu_custom_call.1} parent=1 // pred_check
      %p62 = pneg %p61
    $region27: #{tpu_custom_call.1} parent=1 // pred_check_branch
      %64 = sbr.rel (%p62) target = $region29
    $region28: #{tpu_custom_call.1} parent=1 // pred_region
      %v65 = vld [vmem:[#allocation8] sm:$0x3]
      %66 = vst [vmem:[#allocation2] sm:$0x3] %v65
    $region29: #{tpu_custom_call.1} parent=1 // pred_fallthru
      _
    %v67 = vld [vmem:[#allocation2] sm:$0x3]
    %v68 = vld [vmem:[#allocation6] sm:$0xff]
    %v69 = vld [vmem:[#allocation6 + $0x8] sm:$0xff]
    %v70 = vld [vmem:[#allocation6 + $0x10] sm:$0xff]
    %v71 = vld [vmem:[#allocation6 + $0x18] sm:$0xff]
    %v72 = vld [vmem:[#allocation6 + $0x20] sm:$0xff]
    %v73 = vld [vmem:[#allocation6 + $0x28] sm:$0xff]
    %v74 = vld [vmem:[#allocation6 + $0x30] sm:$0xff]
    %v75 = vld [vmem:[#allocation6 + $0x38] sm:$0xff]
    %v76 = vld [vmem:[#allocation6 + $0x40] sm:$0xff]
    %v77 = vld [vmem:[#allocation6 + $0x48] sm:$0xff]
    %v78 = vld [vmem:[#allocation6 + $0x50] sm:$0xff]
    %v79 = vld [vmem:[#allocation6 + $0x58] sm:$0xff]
    %v80 = vld [vmem:[#allocation6 + $0x60] sm:$0xff]
    %v81 = vld [vmem:[#allocation6 + $0x68] sm:$0xff]
    %v82 = vld [vmem:[#allocation6 + $0x70] sm:$0xff]
    %v83 = vld [vmem:[#allocation6 + $0x78] sm:$0xff]
    %v84 = vld [vmem:[#allocation6 + $0x80] sm:$0xff]
    %v85 = vld [vmem:[#allocation6 + $0x88] sm:$0xff]
    %v86 = vld [vmem:[#allocation6 + $0x90] sm:$0xff]
    %v87 = vld [vmem:[#allocation6 + $0x98] sm:$0xff]
    %v88 = vld [vmem:[#allocation6 + $0xa0] sm:$0xff]
    %v89 = vld [vmem:[#allocation6 + $0xa8] sm:$0xff]
    %v90 = vld [vmem:[#allocation6 + $0xb0] sm:$0xff]
    %v91 = vld [vmem:[#allocation6 + $0xb8] sm:$0xff]
    %v92 = vld [vmem:[#allocation6 + $0xc0] sm:$0xff]
    %v93 = vld [vmem:[#allocation6 + $0xc8] sm:$0xff]
    %v94 = vld [vmem:[#allocation6 + $0xd0] sm:$0xff]
    %v95 = vld [vmem:[#allocation6 + $0xd8] sm:$0xff]
    %v96 = vld [vmem:[#allocation6 + $0xe0] sm:$0xff]
    %v97 = vld [vmem:[#allocation6 + $0xe8] sm:$0xff]
    %v98 = vld [vmem:[#allocation6 + $0xf0] sm:$0xff]
    %v99 = vld [vmem:[#allocation6 + $0xf8] sm:$0xff]
    %v100 = vld [vmem:[#allocation6 + $0x100] sm:$0xff]
    %v101 = vld [vmem:[#allocation6 + $0x108] sm:$0xff]
    %v102 = vld [vmem:[#allocation6 + $0x110] sm:$0xff]
    %v103 = vld [vmem:[#allocation6 + $0x118] sm:$0xff]
    %v104 = vld [vmem:[#allocation6 + $0x120] sm:$0xff]
    %v105 = vld [vmem:[#allocation6 + $0x128] sm:$0xff]
    %v106 = vld [vmem:[#allocation6 + $0x130] sm:$0xff]
    %v107 = vld [vmem:[#allocation6 + $0x138] sm:$0xff]
    %v108 = vld [vmem:[#allocation6 + $0x140] sm:$0xff]
    %v109 = vld [vmem:[#allocation6 + $0x148] sm:$0xff]
    %v110 = vld [vmem:[#allocation6 + $0x150] sm:$0xff]
    %v111 = vld [vmem:[#allocation6 + $0x158] sm:$0xff]
    %v112 = vld [vmem:[#allocation6 + $0x160] sm:$0xff]
    %v113 = vld [vmem:[#allocation6 + $0x168] sm:$0xff]
    %v114 = vld [vmem:[#allocation6 + $0x170] sm:$0xff]
    %v115 = vld [vmem:[#allocation6 + $0x178] sm:$0xff]
    %v116 = vld [vmem:[#allocation6 + $0x180] sm:$0xff]
    %v117 = vld [vmem:[#allocation6 + $0x188] sm:$0xff]
    %v118 = vld [vmem:[#allocation6 + $0x190] sm:$0xff]
    %v119 = vld [vmem:[#allocation6 + $0x198] sm:$0xff]
    %v120 = vld [vmem:[#allocation6 + $0x1a0] sm:$0xff]
    %v121 = vld [vmem:[#allocation6 + $0x1a8] sm:$0xff]
    %v122 = vld [vmem:[#allocation6 + $0x1b0] sm:$0xff]
    %v123 = vld [vmem:[#allocation6 + $0x1b8] sm:$0xff]
    %v124 = vld [vmem:[#allocation6 + $0x1c0] sm:$0xff]
    %v125 = vld [vmem:[#allocation6 + $0x1c8] sm:$0xff]
    %v126 = vld [vmem:[#allocation6 + $0x1d0] sm:$0xff]
    %v127 = vld [vmem:[#allocation6 + $0x1d8] sm:$0xff]
    %v128 = vld [vmem:[#allocation6 + $0x1e0] sm:$0xff]
    %v129 = vld [vmem:[#allocation6 + $0x1e8] sm:$0xff]
    %v130 = vld [vmem:[#allocation6 + $0x1f0] sm:$0xff]
    %v131 = vld [vmem:[#allocation6 + $0x1f8] sm:$0xff]
    %v132 = vld [vmem:[#allocation3] ss:$8 sm:$0xf]
    %v134 = vperm.slane %v132, 0
    %v135 = vperm.slane %v132, 1
    %v136 = vperm.slane %v132, 2
    %v137 = vperm.slane %v132, 3
    %142 = vmatpush.msra.mxu0 %v128
    %143 = vmatpush.msra.mxu0 %v124
    %144 = vmatpush.msra.mxu0 %v120
    %145 = vmatpush.msra.mxu0 %v116
    %146 = vmatpush.msra.mxu0 %v112
    %147 = vmatpush.msra.mxu0 %v108
    %148 = vmatpush.msra.mxu0 %v104
    %149 = vmatpush.msra.mxu0 %v100
    %150 = vmatpush.msra.mxu0 %v96
    %151 = vmatpush.msra.mxu0 %v92
    %152 = vmatpush.msra.mxu0 %v88
    %153 = vmatpush.msra.mxu0 %v84
    %154 = vmatpush.msra.mxu0 %v80
    %155 = vmatpush.msra.mxu0 %v76
    %156 = vmatpush.msra.mxu0 %v72
    %157 = vmatpush.msra.mxu0 %v68
    %158 = vmatmul.f32.gmra.mxu0 %v67
    %v159 = vpop.f32.mrf.mxu0
    %v160 = vadd.f32 %v134, %v159
    %161 = vdwg.mxu0
    %162 = vmatpush.msra.mxu0 %v129
    %163 = vmatpush.msra.mxu0 %v125
    %164 = vmatpush.msra.mxu0 %v121
    %165 = vmatpush.msra.mxu0 %v117
    %166 = vmatpush.msra.mxu0 %v113
    %167 = vmatpush.msra.mxu0 %v109
    %168 = vmatpush.msra.mxu0 %v105
    %169 = vmatpush.msra.mxu0 %v101
    %170 = vmatpush.msra.mxu0 %v97
    %171 = vmatpush.msra.mxu0 %v93
    %172 = vmatpush.msra.mxu0 %v89
    %173 = vmatpush.msra.mxu0 %v85
    %174 = vmatpush.msra.mxu0 %v81
    %175 = vmatpush.msra.mxu0 %v77
    %176 = vmatpush.msra.mxu0 %v73
    %177 = vmatpush.msra.mxu0 %v69
    %178 = vmatmul.f32.gmra.mxu0 %v67
    %v179 = vpop.f32.mrf.mxu0
    %v180 = vadd.f32 %v135, %v179
    %181 = vdwg.mxu0
    %182 = vmatpush.msra.mxu0 %v130
    %183 = vmatpush.msra.mxu0 %v126
    %184 = vmatpush.msra.mxu0 %v122
    %185 = vmatpush.msra.mxu0 %v118
    %186 = vmatpush.msra.mxu0 %v114
    %187 = vmatpush.msra.mxu0 %v110
    %188 = vmatpush.msra.mxu0 %v106
    %189 = vmatpush.msra.mxu0 %v102
    %190 = vmatpush.msra.mxu0 %v98
    %191 = vmatpush.msra.mxu0 %v94
    %192 = vmatpush.msra.mxu0 %v90
    %193 = vmatpush.msra.mxu0 %v86
    %194 = vmatpush.msra.mxu0 %v82
    %195 = vmatpush.msra.mxu0 %v78
    %196 = vmatpush.msra.mxu0 %v74
    %197 = vmatpush.msra.mxu0 %v70
    %198 = vmatmul.f32.gmra.mxu0 %v67
    %v199 = vpop.f32.mrf.mxu0
    %v200 = vadd.f32 %v136, %v199
    %201 = vdwg.mxu0
    %202 = vmatpush.msra.mxu0 %v131
    %203 = vmatpush.msra.mxu0 %v127
    %204 = vmatpush.msra.mxu0 %v123
    %205 = vmatpush.msra.mxu0 %v119
    %206 = vmatpush.msra.mxu0 %v115
    %207 = vmatpush.msra.mxu0 %v111
    %208 = vmatpush.msra.mxu0 %v107
    %209 = vmatpush.msra.mxu0 %v103
    %210 = vmatpush.msra.mxu0 %v99
    %211 = vmatpush.msra.mxu0 %v95
    %212 = vmatpush.msra.mxu0 %v91
    %213 = vmatpush.msra.mxu0 %v87
    %214 = vmatpush.msra.mxu0 %v83
    %215 = vmatpush.msra.mxu0 %v79
    %216 = vmatpush.msra.mxu0 %v75
    %217 = vmatpush.msra.mxu0 %v71
    %218 = vmatmul.f32.gmra.mxu0 %v67
    %v219 = vpop.f32.mrf.mxu0
    %v220 = vadd.f32 %v137, %v219
    %221 = vdwg.mxu0
    %v222 = vxor.u32 %v160, 2147483648
    %v223 = vxor.u32 %v180, 2147483648
    %v224 = vxor.u32 %v200, 2147483648
    %v225 = vmul.f32 %v222, 1.442695
    %v226 = vpow.pop %v225
    %v227 = vmul.f32 %v223, 1.442695
    %v228 = vpow.pop %v227
    %v229 = vmul.f32 %v224, 1.442695
    %v230 = vpow.pop %v229
    %v231 = vadd.f32 %v226, 1.0
    %v232 = vadd.f32 %v228, 1.0
    %v233 = vadd.f32 %v230, 1.0
    %v234 = vrcp.pop %v231
    %v235 = vmul.f32 %v231, %v234
    %v236 = vsub.f32 1.0, %v235
    %v237 = vmul.f32 %v234, %v236
    %v238 = vadd.f32 %v234, %v237
    %vm239 = vweird.f32 %v231
    %vm240 = vweird.f32 %v234
    %vm241 = vmor %vm239, %vm240
    %v242 = vsel %vm241, %v234, %v238
    %v243 = vand.u32 2147483647, %v231
    %vm244 = vcmp.eq.f32.partialorder %v243, 8.507059e+37
    %v245 = vand.u32 %v231, 2147483648
    %v246 = vor.u32 1.1754944e-38, %v245
    %v247 = vsel %vm244, %v246, %v242
    %v248 = vmul.f32 1.0, %v247
    %v249 = vrcp.pop %v232
    %v250 = vmul.f32 %v232, %v249
    %v251 = vsub.f32 1.0, %v250
    %v252 = vmul.f32 %v249, %v251
    %v253 = vadd.f32 %v249, %v252
    %vm254 = vweird.f32 %v232
    %vm255 = vweird.f32 %v249
    %vm256 = vmor %vm254, %vm255
    %v257 = vsel %vm256, %v249, %v253
    %v258 = vand.u32 2147483647, %v232
    %vm259 = vcmp.eq.f32.partialorder %v258, 8.507059e+37
    %v260 = vand.u32 %v232, 2147483648
    %v261 = vor.u32 1.1754944e-38, %v260
    %v262 = vsel %vm259, %v261, %v257
    %v263 = vmul.f32 1.0, %v262
    %v264 = vrcp.pop %v233
    %v265 = vmul.f32 %v233, %v264
    %v266 = vsub.f32 1.0, %v265
    %v267 = vmul.f32 %v264, %v266
    %v268 = vadd.f32 %v264, %v267
    %vm269 = vweird.f32 %v233
    %vm270 = vweird.f32 %v264
    %vm271 = vmor %vm269, %vm270
    %v272 = vsel %vm271, %v264, %v268
    %v273 = vand.u32 2147483647, %v233
    %vm274 = vcmp.eq.f32.partialorder %v273, 8.507059e+37
    %v275 = vand.u32 %v233, 2147483648
    %v276 = vor.u32 1.1754944e-38, %v275
    %v277 = vsel %vm274, %v276, %v272
    %v278 = vmul.f32 1.0, %v277
    %v279 = vtanh.pop %v220
    %v281 = vrot.slane %v67, 1
    %v283 = vmul.f32 %v263, %v281
    %v284 = vmul.f32 %v248, %v279
    %v285 = vadd.f32 %v283, %v284
    %v286 = vtanh.pop %v285
    %v287 = vmul.f32 %v278, %v286
    %s288 = smul.u32 0, 8
    %p289 = scmp.lt.s32.totalorder %s288, 1
    %s290 = scalar_select %p289, 1, 0
    %v291 = vstv %s290
    %vm292 = vcmp.eq.s32.totalorder %v291, 1
    %v293 = vsel %vm292, %v287, %v67
    %v294 = vsel %vm292, %v285, %v281
    %295 = vst [vmem:[#allocation9] sm:$0x1] %v293
    %v296 = vld [vmem:[#allocation6] sm:$0xff]
    %v297 = vld [vmem:[#allocation6 + $0x8] sm:$0xff]
    %v298 = vld [vmem:[#allocation6 + $0x10] sm:$0xff]
    %v299 = vld [vmem:[#allocation6 + $0x18] sm:$0xff]
    %v300 = vld [vmem:[#allocation6 + $0x20] sm:$0xff]
    %v301 = vld [vmem:[#allocation6 + $0x28] sm:$0xff]
    %v302 = vld [vmem:[#allocation6 + $0x30] sm:$0xff]
    %v303 = vld [vmem:[#allocation6 + $0x38] sm:$0xff]
    %v304 = vld [vmem:[#allocation6 + $0x40] sm:$0xff]
    %v305 = vld [vmem:[#allocation6 + $0x48] sm:$0xff]
    %v306 = vld [vmem:[#allocation6 + $0x50] sm:$0xff]
    %v307 = vld [vmem:[#allocation6 + $0x58] sm:$0xff]
    %v308 = vld [vmem:[#allocation6 + $0x60] sm:$0xff]
    %v309 = vld [vmem:[#allocation6 + $0x68] sm:$0xff]
    %v310 = vld [vmem:[#allocation6 + $0x70] sm:$0xff]
    %v311 = vld [vmem:[#allocation6 + $0x78] sm:$0xff]
    %v312 = vld [vmem:[#allocation6 + $0x80] sm:$0xff]
    %v313 = vld [vmem:[#allocation6 + $0x88] sm:$0xff]
    %v314 = vld [vmem:[#allocation6 + $0x90] sm:$0xff]
    %v315 = vld [vmem:[#allocation6 + $0x98] sm:$0xff]
    %v316 = vld [vmem:[#allocation6 + $0xa0] sm:$0xff]
    %v317 = vld [vmem:[#allocation6 + $0xa8] sm:$0xff]
    %v318 = vld [vmem:[#allocation6 + $0xb0] sm:$0xff]
    %v319 = vld [vmem:[#allocation6 + $0xb8] sm:$0xff]
    %v320 = vld [vmem:[#allocation6 + $0xc0] sm:$0xff]
    %v321 = vld [vmem:[#allocation6 + $0xc8] sm:$0xff]
    %v322 = vld [vmem:[#allocation6 + $0xd0] sm:$0xff]
    %v323 = vld [vmem:[#allocation6 + $0xd8] sm:$0xff]
    %v324 = vld [vmem:[#allocation6 + $0xe0] sm:$0xff]
    %v325 = vld [vmem:[#allocation6 + $0xe8] sm:$0xff]
    %v326 = vld [vmem:[#allocation6 + $0xf0] sm:$0xff]
    %v327 = vld [vmem:[#allocation6 + $0xf8] sm:$0xff]
    %v328 = vld [vmem:[#allocation6 + $0x100] sm:$0xff]
    %v329 = vld [vmem:[#allocation6 + $0x108] sm:$0xff]
    %v330 = vld [vmem:[#allocation6 + $0x110] sm:$0xff]
    %v331 = vld [vmem:[#allocation6 + $0x118] sm:$0xff]
    %v332 = vld [vmem:[#allocation6 + $0x120] sm:$0xff]
    %v333 = vld [vmem:[#allocation6 + $0x128] sm:$0xff]
    %v334 = vld [vmem:[#allocation6 + $0x130] sm:$0xff]
    %v335 = vld [vmem:[#allocation6 + $0x138] sm:$0xff]
    %v336 = vld [vmem:[#allocation6 + $0x140] sm:$0xff]
    %v337 = vld [vmem:[#allocation6 + $0x148] sm:$0xff]
    %v338 = vld [vmem:[#allocation6 + $0x150] sm:$0xff]
    %v339 = vld [vmem:[#allocation6 + $0x158] sm:$0xff]
    %v340 = vld [vmem:[#allocation6 + $0x160] sm:$0xff]
    %v341 = vld [vmem:[#allocation6 + $0x168] sm:$0xff]
    %v342 = vld [vmem:[#allocation6 + $0x170] sm:$0xff]
    %v343 = vld [vmem:[#allocation6 + $0x178] sm:$0xff]
    %v344 = vld [vmem:[#allocation6 + $0x180] sm:$0xff]
    %v345 = vld [vmem:[#allocation6 + $0x188] sm:$0xff]
    %v346 = vld [vmem:[#allocation6 + $0x190] sm:$0xff]
    %v347 = vld [vmem:[#allocation6 + $0x198] sm:$0xff]
    %v348 = vld [vmem:[#allocation6 + $0x1a0] sm:$0xff]
    %v349 = vld [vmem:[#allocation6 + $0x1a8] sm:$0xff]
    %v350 = vld [vmem:[#allocation6 + $0x1b0] sm:$0xff]
    %v351 = vld [vmem:[#allocation6 + $0x1b8] sm:$0xff]
    %v352 = vld [vmem:[#allocation6 + $0x1c0] sm:$0xff]
    %v353 = vld [vmem:[#allocation6 + $0x1c8] sm:$0xff]
    %v354 = vld [vmem:[#allocation6 + $0x1d0] sm:$0xff]
    %v355 = vld [vmem:[#allocation6 + $0x1d8] sm:$0xff]
    %v356 = vld [vmem:[#allocation6 + $0x1e0] sm:$0xff]
    %v357 = vld [vmem:[#allocation6 + $0x1e8] sm:$0xff]
    %v358 = vld [vmem:[#allocation6 + $0x1f0] sm:$0xff]
    %v359 = vld [vmem:[#allocation6 + $0x1f8] sm:$0xff]
    %s360 = scalar_lea.vmem [#allocation3], 1
    %v361 = vld [vmem:[%s360] ss:$8 sm:$0xf]
    %v363 = vperm.slane %v361, 0
    %v364 = vperm.slane %v361, 1
    %v365 = vperm.slane %v361, 2
    %v366 = vperm.slane %v361, 3
    %371 = vmatpush.msra.mxu0 %v356
    %372 = vmatpush.msra.mxu0 %v352
    %373 = vmatpush.msra.mxu0 %v348
    %374 = vmatpush.msra.mxu0 %v344
    %375 = vmatpush.msra.mxu0 %v340
    %376 = vmatpush.msra.mxu0 %v336
    %377 = vmatpush.msra.mxu0 %v332
    %378 = vmatpush.msra.mxu0 %v328
    %379 = vmatpush.msra.mxu0 %v324
    %380 = vmatpush.msra.mxu0 %v320
    %381 = vmatpush.msra.mxu0 %v316
    %382 = vmatpush.msra.mxu0 %v312
    %383 = vmatpush.msra.mxu0 %v308
    %384 = vmatpush.msra.mxu0 %v304
    %385 = vmatpush.msra.mxu0 %v300
    %386 = vmatpush.msra.mxu0 %v296
    %387 = vmatmul.f32.gmra.mxu0 %v293
    %v388 = vpop.f32.mrf.mxu0
    %v389 = vadd.f32 %v363, %v388
    %390 = vdwg.mxu0
    %391 = vmatpush.msra.mxu0 %v357
    %392 = vmatpush.msra.mxu0 %v353
    %393 = vmatpush.msra.mxu0 %v349
    %394 = vmatpush.msra.mxu0 %v345
    %395 = vmatpush.msra.mxu0 %v341
    %396 = vmatpush.msra.mxu0 %v337
    %397 = vmatpush.msra.mxu0 %v333
    %398 = vmatpush.msra.mxu0 %v329
    %399 = vmatpush.msra.mxu0 %v325
    %400 = vmatpush.msra.mxu0 %v321
    %401 = vmatpush.msra.mxu0 %v317
    %402 = vmatpush.msra.mxu0 %v313
    %403 = vmatpush.msra.mxu0 %v309
    %404 = vmatpush.msra.mxu0 %v305
    %405 = vmatpush.msra.mxu0 %v301
    %406 = vmatpush.msra.mxu0 %v297
    %407 = vmatmul.f32.gmra.mxu0 %v293
    %v408 = vpop.f32.mrf.mxu0
    %v409 = vadd.f32 %v364, %v408
    %410 = vdwg.mxu0
    %411 = vmatpush.msra.mxu0 %v358
    %412 = vmatpush.msra.mxu0 %v354
    %413 = vmatpush.msra.mxu0 %v350
    %414 = vmatpush.msra.mxu0 %v346
    %415 = vmatpush.msra.mxu0 %v342
    %416 = vmatpush.msra.mxu0 %v338
    %417 = vmatpush.msra.mxu0 %v334
    %418 = vmatpush.msra.mxu0 %v330
    %419 = vmatpush.msra.mxu0 %v326
    %420 = vmatpush.msra.mxu0 %v322
    %421 = vmatpush.msra.mxu0 %v318
    %422 = vmatpush.msra.mxu0 %v314
    %423 = vmatpush.msra.mxu0 %v310
    %424 = vmatpush.msra.mxu0 %v306
    %425 = vmatpush.msra.mxu0 %v302
    %426 = vmatpush.msra.mxu0 %v298
    %427 = vmatmul.f32.gmra.mxu0 %v293
    %v428 = vpop.f32.mrf.mxu0
    %v429 = vadd.f32 %v365, %v428
    %430 = vdwg.mxu0
    %431 = vmatpush.msra.mxu0 %v359
    %432 = vmatpush.msra.mxu0 %v355
    %433 = vmatpush.msra.mxu0 %v351
    %434 = vmatpush.msra.mxu0 %v347
    %435 = vmatpush.msra.mxu0 %v343
    %436 = vmatpush.msra.mxu0 %v339
    %437 = vmatpush.msra.mxu0 %v335
    %438 = vmatpush.msra.mxu0 %v331
    %439 = vmatpush.msra.mxu0 %v327
    %440 = vmatpush.msra.mxu0 %v323
    %441 = vmatpush.msra.mxu0 %v319
    %442 = vmatpush.msra.mxu0 %v315
    %443 = vmatpush.msra.mxu0 %v311
    %444 = vmatpush.msra.mxu0 %v307
    %445 = vmatpush.msra.mxu0 %v303
    %446 = vmatpush.msra.mxu0 %v299
    %447 = vmatmul.f32.gmra.mxu0 %v293
    %v448 = vpop.f32.mrf.mxu0
    %v449 = vadd.f32 %v366, %v448
    %450 = vdwg.mxu0
    %v451 = vxor.u32 %v389, 2147483648
    %v452 = vxor.u32 %v409, 2147483648
    %v453 = vxor.u32 %v429, 2147483648
    %v454 = vmul.f32 %v451, 1.442695
    %v455 = vpow.pop %v454
    %v456 = vmul.f32 %v452, 1.442695
    %v457 = vpow.pop %v456
    %v458 = vmul.f32 %v453, 1.442695
    %v459 = vpow.pop %v458
    %v460 = vadd.f32 %v455, 1.0
    %v461 = vadd.f32 %v457, 1.0
    %v462 = vadd.f32 %v459, 1.0
    %v463 = vrcp.pop %v460
    %v464 = vmul.f32 %v460, %v463
    %v465 = vsub.f32 1.0, %v464
    %v466 = vmul.f32 %v463, %v465
    %v467 = vadd.f32 %v463, %v466
    %vm468 = vweird.f32 %v460
    %vm469 = vweird.f32 %v463
    %vm470 = vmor %vm468, %vm469
    %v471 = vsel %vm470, %v463, %v467
    %v472 = vand.u32 2147483647, %v460
    %vm473 = vcmp.eq.f32.partialorder %v472, 8.507059e+37
    %v474 = vand.u32 %v460, 2147483648
    %v475 = vor.u32 1.1754944e-38, %v474
    %v476 = vsel %vm473, %v475, %v471
    %v477 = vmul.f32 1.0, %v476
    %v478 = vrcp.pop %v461
    %v479 = vmul.f32 %v461, %v478
    %v480 = vsub.f32 1.0, %v479
    %v481 = vmul.f32 %v478, %v480
    %v482 = vadd.f32 %v478, %v481
    %vm483 = vweird.f32 %v461
    %vm484 = vweird.f32 %v478
    %vm485 = vmor %vm483, %vm484
    %v486 = vsel %vm485, %v478, %v482
    %v487 = vand.u32 2147483647, %v461
    %vm488 = vcmp.eq.f32.partialorder %v487, 8.507059e+37
    %v489 = vand.u32 %v461, 2147483648
    %v490 = vor.u32 1.1754944e-38, %v489
    %v491 = vsel %vm488, %v490, %v486
    %v492 = vmul.f32 1.0, %v491
    %v493 = vrcp.pop %v462
    %v494 = vmul.f32 %v462, %v493
    %v495 = vsub.f32 1.0, %v494
    %v496 = vmul.f32 %v493, %v495
    %v497 = vadd.f32 %v493, %v496
    %vm498 = vweird.f32 %v462
    %vm499 = vweird.f32 %v493
    %vm500 = vmor %vm498, %vm499
    %v501 = vsel %vm500, %v493, %v497
    %v502 = vand.u32 2147483647, %v462
    %vm503 = vcmp.eq.f32.partialorder %v502, 8.507059e+37
    %v504 = vand.u32 %v462, 2147483648
    %v505 = vor.u32 1.1754944e-38, %v504
    %v506 = vsel %vm503, %v505, %v501
    %v507 = vmul.f32 1.0, %v506
    %v508 = vtanh.pop %v449
    %v509 = vmul.f32 %v492, %v294
    %v510 = vmul.f32 %v477, %v508
    %v511 = vadd.f32 %v509, %v510
    %v512 = vtanh.pop %v511
    %v513 = vmul.f32 %v507, %v512
    %s514 = sadd.s32 %s288, 1
    %p515 = scmp.lt.s32.totalorder %s514, 1
    %s516 = scalar_select %p515, 1, 0
    %v517 = vstv %s516
    %vm518 = vcmp.eq.s32.totalorder %v517, 1
    %v519 = vsel %vm518, %v513, %v293
    %v520 = vsel %vm518, %v511, %v294
    %521 = vst [vmem:[#allocation9 + $0x1] sm:$0x1] %v519
    %v522 = vld [vmem:[#allocation6] sm:$0xff]
    %v523 = vld [vmem:[#allocation6 + $0x8] sm:$0xff]
    %v524 = vld [vmem:[#allocation6 + $0x10] sm:$0xff]
    %v525 = vld [vmem:[#allocation6 + $0x18] sm:$0xff]
    %v526 = vld [vmem:[#allocation6 + $0x20] sm:$0xff]
    %v527 = vld [vmem:[#allocation6 + $0x28] sm:$0xff]
    %v528 = vld [vmem:[#allocation6 + $0x30] sm:$0xff]
    %v529 = vld [vmem:[#allocation6 + $0x38] sm:$0xff]
    %v530 = vld [vmem:[#allocation6 + $0x40] sm:$0xff]
    %v531 = vld [vmem:[#allocation6 + $0x48] sm:$0xff]
    %v532 = vld [vmem:[#allocation6 + $0x50] sm:$0xff]
    %v533 = vld [vmem:[#allocation6 + $0x58] sm:$0xff]
    %v534 = vld [vmem:[#allocation6 + $0x60] sm:$0xff]
    %v535 = vld [vmem:[#allocation6 + $0x68] sm:$0xff]
    %v536 = vld [vmem:[#allocation6 + $0x70] sm:$0xff]
    %v537 = vld [vmem:[#allocation6 + $0x78] sm:$0xff]
    %v538 = vld [vmem:[#allocation6 + $0x80] sm:$0xff]
    %v539 = vld [vmem:[#allocation6 + $0x88] sm:$0xff]
    %v540 = vld [vmem:[#allocation6 + $0x90] sm:$0xff]
    %v541 = vld [vmem:[#allocation6 + $0x98] sm:$0xff]
    %v542 = vld [vmem:[#allocation6 + $0xa0] sm:$0xff]
    %v543 = vld [vmem:[#allocation6 + $0xa8] sm:$0xff]
    %v544 = vld [vmem:[#allocation6 + $0xb0] sm:$0xff]
    %v545 = vld [vmem:[#allocation6 + $0xb8] sm:$0xff]
    %v546 = vld [vmem:[#allocation6 + $0xc0] sm:$0xff]
    %v547 = vld [vmem:[#allocation6 + $0xc8] sm:$0xff]
    %v548 = vld [vmem:[#allocation6 + $0xd0] sm:$0xff]
    %v549 = vld [vmem:[#allocation6 + $0xd8] sm:$0xff]
    %v550 = vld [vmem:[#allocation6 + $0xe0] sm:$0xff]
    %v551 = vld [vmem:[#allocation6 + $0xe8] sm:$0xff]
    %v552 = vld [vmem:[#allocation6 + $0xf0] sm:$0xff]
    %v553 = vld [vmem:[#allocation6 + $0xf8] sm:$0xff]
    %v554 = vld [vmem:[#allocation6 + $0x100] sm:$0xff]
    %v555 = vld [vmem:[#allocation6 + $0x108] sm:$0xff]
    %v556 = vld [vmem:[#allocation6 + $0x110] sm:$0xff]
    %v557 = vld [vmem:[#allocation6 + $0x118] sm:$0xff]
    %v558 = vld [vmem:[#allocation6 + $0x120] sm:$0xff]
    %v559 = vld [vmem:[#allocation6 + $0x128] sm:$0xff]
    %v560 = vld [vmem:[#allocation6 + $0x130] sm:$0xff]
    %v561 = vld [vmem:[#allocation6 + $0x138] sm:$0xff]
    %v562 = vld [vmem:[#allocation6 + $0x140] sm:$0xff]
    %v563 = vld [vmem:[#allocation6 + $0x148] sm:$0xff]
    %v564 = vld [vmem:[#allocation6 + $0x150] sm:$0xff]
    %v565 = vld [vmem:[#allocation6 + $0x158] sm:$0xff]
    %v566 = vld [vmem:[#allocation6 + $0x160] sm:$0xff]
    %v567 = vld [vmem:[#allocation6 + $0x168] sm:$0xff]
    %v568 = vld [vmem:[#allocation6 + $0x170] sm:$0xff]
    %v569 = vld [vmem:[#allocation6 + $0x178] sm:$0xff]
    %v570 = vld [vmem:[#allocation6 + $0x180] sm:$0xff]
    %v571 = vld [vmem:[#allocation6 + $0x188] sm:$0xff]
    %v572 = vld [vmem:[#allocation6 + $0x190] sm:$0xff]
    %v573 = vld [vmem:[#allocation6 + $0x198] sm:$0xff]
    %v574 = vld [vmem:[#allocation6 + $0x1a0] sm:$0xff]
    %v575 = vld [vmem:[#allocation6 + $0x1a8] sm:$0xff]
    %v576 = vld [vmem:[#allocation6 + $0x1b0] sm:$0xff]
    %v577 = vld [vmem:[#allocation6 + $0x1b8] sm:$0xff]
    %v578 = vld [vmem:[#allocation6 + $0x1c0] sm:$0xff]
    %v579 = vld [vmem:[#allocation6 + $0x1c8] sm:$0xff]
    %v580 = vld [vmem:[#allocation6 + $0x1d0] sm:$0xff]
    %v581 = vld [vmem:[#allocation6 + $0x1d8] sm:$0xff]
    %v582 = vld [vmem:[#allocation6 + $0x1e0] sm:$0xff]
    %v583 = vld [vmem:[#allocation6 + $0x1e8] sm:$0xff]
    %v584 = vld [vmem:[#allocation6 + $0x1f0] sm:$0xff]
    %v585 = vld [vmem:[#allocation6 + $0x1f8] sm:$0xff]
    %s586 = scalar_lea.vmem [#allocation3], 2
    %v587 = vld [vmem:[%s586] ss:$8 sm:$0xf]
    %v589 = vperm.slane %v587, 0
    %v590 = vperm.slane %v587, 1
    %v591 = vperm.slane %v587, 2
    %v592 = vperm.slane %v587, 3
    %597 = vmatpush.msra.mxu0 %v582
    %598 = vmatpush.msra.mxu0 %v578
    %599 = vmatpush.msra.mxu0 %v574
    %600 = vmatpush.msra.mxu0 %v570
    %601 = vmatpush.msra.mxu0 %v566
    %602 = vmatpush.msra.mxu0 %v562
    %603 = vmatpush.msra.mxu0 %v558
    %604 = vmatpush.msra.mxu0 %v554
    %605 = vmatpush.msra.mxu0 %v550
    %606 = vmatpush.msra.mxu0 %v546
    %607 = vmatpush.msra.mxu0 %v542
    %608 = vmatpush.msra.mxu0 %v538
    %609 = vmatpush.msra.mxu0 %v534
    %610 = vmatpush.msra.mxu0 %v530
    %611 = vmatpush.msra.mxu0 %v526
    %612 = vmatpush.msra.mxu0 %v522
    %613 = vmatmul.f32.gmra.mxu0 %v519
    %v614 = vpop.f32.mrf.mxu0
    %v615 = vadd.f32 %v589, %v614
    %616 = vdwg.mxu0
    %617 = vmatpush.msra.mxu0 %v583
    %618 = vmatpush.msra.mxu0 %v579
    %619 = vmatpush.msra.mxu0 %v575
    %620 = vmatpush.msra.mxu0 %v571
    %621 = vmatpush.msra.mxu0 %v567
    %622 = vmatpush.msra.mxu0 %v563
    %623 = vmatpush.msra.mxu0 %v559
    %624 = vmatpush.msra.mxu0 %v555
    %625 = vmatpush.msra.mxu0 %v551
    %626 = vmatpush.msra.mxu0 %v547
    %627 = vmatpush.msra.mxu0 %v543
    %628 = vmatpush.msra.mxu0 %v539
    %629 = vmatpush.msra.mxu0 %v535
    %630 = vmatpush.msra.mxu0 %v531
    %631 = vmatpush.msra.mxu0 %v527
    %632 = vmatpush.msra.mxu0 %v523
    %633 = vmatmul.f32.gmra.mxu0 %v519
    %v634 = vpop.f32.mrf.mxu0
    %v635 = vadd.f32 %v590, %v634
    %636 = vdwg.mxu0
    %637 = vmatpush.msra.mxu0 %v584
    %638 = vmatpush.msra.mxu0 %v580
    %639 = vmatpush.msra.mxu0 %v576
    %640 = vmatpush.msra.mxu0 %v572
    %641 = vmatpush.msra.mxu0 %v568
    %642 = vmatpush.msra.mxu0 %v564
    %643 = vmatpush.msra.mxu0 %v560
    %644 = vmatpush.msra.mxu0 %v556
    %645 = vmatpush.msra.mxu0 %v552
    %646 = vmatpush.msra.mxu0 %v548
    %647 = vmatpush.msra.mxu0 %v544
    %648 = vmatpush.msra.mxu0 %v540
    %649 = vmatpush.msra.mxu0 %v536
    %650 = vmatpush.msra.mxu0 %v532
    %651 = vmatpush.msra.mxu0 %v528
    %652 = vmatpush.msra.mxu0 %v524
    %653 = vmatmul.f32.gmra.mxu0 %v519
    %v654 = vpop.f32.mrf.mxu0
    %v655 = vadd.f32 %v591, %v654
    %656 = vdwg.mxu0
    %657 = vmatpush.msra.mxu0 %v585
    %658 = vmatpush.msra.mxu0 %v581
    %659 = vmatpush.msra.mxu0 %v577
    %660 = vmatpush.msra.mxu0 %v573
    %661 = vmatpush.msra.mxu0 %v569
    %662 = vmatpush.msra.mxu0 %v565
    %663 = vmatpush.msra.mxu0 %v561
    %664 = vmatpush.msra.mxu0 %v557
    %665 = vmatpush.msra.mxu0 %v553
    %666 = vmatpush.msra.mxu0 %v549
    %667 = vmatpush.msra.mxu0 %v545
    %668 = vmatpush.msra.mxu0 %v541
    %669 = vmatpush.msra.mxu0 %v537
    %670 = vmatpush.msra.mxu0 %v533
    %671 = vmatpush.msra.mxu0 %v529
    %672 = vmatpush.msra.mxu0 %v525
    %673 = vmatmul.f32.gmra.mxu0 %v519
    %v674 = vpop.f32.mrf.mxu0
    %v675 = vadd.f32 %v592, %v674
    %676 = vdwg.mxu0
    %v677 = vxor.u32 %v615, 2147483648
    %v678 = vxor.u32 %v635, 2147483648
    %v679 = vxor.u32 %v655, 2147483648
    %v680 = vmul.f32 %v677, 1.442695
    %v681 = vpow.pop %v680
    %v682 = vmul.f32 %v678, 1.442695
    %v683 = vpow.pop %v682
    %v684 = vmul.f32 %v679, 1.442695
    %v685 = vpow.pop %v684
    %v686 = vadd.f32 %v681, 1.0
    %v687 = vadd.f32 %v683, 1.0
    %v688 = vadd.f32 %v685, 1.0
    %v689 = vrcp.pop %v686
    %v690 = vmul.f32 %v686, %v689
    %v691 = vsub.f32 1.0, %v690
    %v692 = vmul.f32 %v689, %v691
    %v693 = vadd.f32 %v689, %v692
    %vm694 = vweird.f32 %v686
    %vm695 = vweird.f32 %v689
    %vm696 = vmor %vm694, %vm695
    %v697 = vsel %vm696, %v689, %v693
    %v698 = vand.u32 2147483647, %v686
    %vm699 = vcmp.eq.f32.partialorder %v698, 8.507059e+37
    %v700 = vand.u32 %v686, 2147483648
    %v701 = vor.u32 1.1754944e-38, %v700
    %v702 = vsel %vm699, %v701, %v697
    %v703 = vmul.f32 1.0, %v702
    %v704 = vrcp.pop %v687
    %v705 = vmul.f32 %v687, %v704
    %v706 = vsub.f32 1.0, %v705
    %v707 = vmul.f32 %v704, %v706
    %v708 = vadd.f32 %v704, %v707
    %vm709 = vweird.f32 %v687
    %vm710 = vweird.f32 %v704
    %vm711 = vmor %vm709, %vm710
    %v712 = vsel %vm711, %v704, %v708
    %v713 = vand.u32 2147483647, %v687
    %vm714 = vcmp.eq.f32.partialorder %v713, 8.507059e+37
    %v715 = vand.u32 %v687, 2147483648
    %v716 = vor.u32 1.1754944e-38, %v715
    %v717 = vsel %vm714, %v716, %v712
    %v718 = vmul.f32 1.0, %v717
    %v719 = vrcp.pop %v688
    %v720 = vmul.f32 %v688, %v719
    %v721 = vsub.f32 1.0, %v720
    %v722 = vmul.f32 %v719, %v721
    %v723 = vadd.f32 %v719, %v722
    %vm724 = vweird.f32 %v688
    %vm725 = vweird.f32 %v719
    %vm726 = vmor %vm724, %vm725
    %v727 = vsel %vm726, %v719, %v723
    %v728 = vand.u32 2147483647, %v688
    %vm729 = vcmp.eq.f32.partialorder %v728, 8.507059e+37
    %v730 = vand.u32 %v688, 2147483648
    %v731 = vor.u32 1.1754944e-38, %v730
    %v732 = vsel %vm729, %v731, %v727
    %v733 = vmul.f32 1.0, %v732
    %v734 = vtanh.pop %v675
    %v735 = vmul.f32 %v718, %v520
    %v736 = vmul.f32 %v703, %v734
    %v737 = vadd.f32 %v735, %v736
    %v738 = vtanh.pop %v737
    %v739 = vmul.f32 %v733, %v738
    %s740 = sadd.s32 %s288, 2
    %p741 = scmp.lt.s32.totalorder %s740, 1
    %s742 = scalar_select %p741, 1, 0
    %v743 = vstv %s742
    %vm744 = vcmp.eq.s32.totalorder %v743, 1
    %v745 = vsel %vm744, %v739, %v519
    %v746 = vsel %vm744, %v737, %v520
    %747 = vst [vmem:[#allocation9 + $0x2] sm:$0x1] %v745
    %v748 = vld [vmem:[#allocation6] sm:$0xff]
    %v749 = vld [vmem:[#allocation6 + $0x8] sm:$0xff]
    %v750 = vld [vmem:[#allocation6 + $0x10] sm:$0xff]
    %v751 = vld [vmem:[#allocation6 + $0x18] sm:$0xff]
    %v752 = vld [vmem:[#allocation6 + $0x20] sm:$0xff]
    %v753 = vld [vmem:[#allocation6 + $0x28] sm:$0xff]
    %v754 = vld [vmem:[#allocation6 + $0x30] sm:$0xff]
    %v755 = vld [vmem:[#allocation6 + $0x38] sm:$0xff]
    %v756 = vld [vmem:[#allocation6 + $0x40] sm:$0xff]
    %v757 = vld [vmem:[#allocation6 + $0x48] sm:$0xff]
    %v758 = vld [vmem:[#allocation6 + $0x50] sm:$0xff]
    %v759 = vld [vmem:[#allocation6 + $0x58] sm:$0xff]
    %v760 = vld [vmem:[#allocation6 + $0x60] sm:$0xff]
    %v761 = vld [vmem:[#allocation6 + $0x68] sm:$0xff]
    %v762 = vld [vmem:[#allocation6 + $0x70] sm:$0xff]
    %v763 = vld [vmem:[#allocation6 + $0x78] sm:$0xff]
    %v764 = vld [vmem:[#allocation6 + $0x80] sm:$0xff]
    %v765 = vld [vmem:[#allocation6 + $0x88] sm:$0xff]
    %v766 = vld [vmem:[#allocation6 + $0x90] sm:$0xff]
    %v767 = vld [vmem:[#allocation6 + $0x98] sm:$0xff]
    %v768 = vld [vmem:[#allocation6 + $0xa0] sm:$0xff]
    %v769 = vld [vmem:[#allocation6 + $0xa8] sm:$0xff]
    %v770 = vld [vmem:[#allocation6 + $0xb0] sm:$0xff]
    %v771 = vld [vmem:[#allocation6 + $0xb8] sm:$0xff]
    %v772 = vld [vmem:[#allocation6 + $0xc0] sm:$0xff]
    %v773 = vld [vmem:[#allocation6 + $0xc8] sm:$0xff]
    %v774 = vld [vmem:[#allocation6 + $0xd0] sm:$0xff]
    %v775 = vld [vmem:[#allocation6 + $0xd8] sm:$0xff]
    %v776 = vld [vmem:[#allocation6 + $0xe0] sm:$0xff]
    %v777 = vld [vmem:[#allocation6 + $0xe8] sm:$0xff]
    %v778 = vld [vmem:[#allocation6 + $0xf0] sm:$0xff]
    %v779 = vld [vmem:[#allocation6 + $0xf8] sm:$0xff]
    %v780 = vld [vmem:[#allocation6 + $0x100] sm:$0xff]
    %v781 = vld [vmem:[#allocation6 + $0x108] sm:$0xff]
    %v782 = vld [vmem:[#allocation6 + $0x110] sm:$0xff]
    %v783 = vld [vmem:[#allocation6 + $0x118] sm:$0xff]
    %v784 = vld [vmem:[#allocation6 + $0x120] sm:$0xff]
    %v785 = vld [vmem:[#allocation6 + $0x128] sm:$0xff]
    %v786 = vld [vmem:[#allocation6 + $0x130] sm:$0xff]
    %v787 = vld [vmem:[#allocation6 + $0x138] sm:$0xff]
    %v788 = vld [vmem:[#allocation6 + $0x140] sm:$0xff]
    %v789 = vld [vmem:[#allocation6 + $0x148] sm:$0xff]
    %v790 = vld [vmem:[#allocation6 + $0x150] sm:$0xff]
    %v791 = vld [vmem:[#allocation6 + $0x158] sm:$0xff]
    %v792 = vld [vmem:[#allocation6 + $0x160] sm:$0xff]
    %v793 = vld [vmem:[#allocation6 + $0x168] sm:$0xff]
    %v794 = vld [vmem:[#allocation6 + $0x170] sm:$0xff]
    %v795 = vld [vmem:[#allocation6 + $0x178] sm:$0xff]
    %v796 = vld [vmem:[#allocation6 + $0x180] sm:$0xff]
    %v797 = vld [vmem:[#allocation6 + $0x188] sm:$0xff]
    %v798 = vld [vmem:[#allocation6 + $0x190] sm:$0xff]
    %v799 = vld [vmem:[#allocation6 + $0x198] sm:$0xff]
    %v800 = vld [vmem:[#allocation6 + $0x1a0] sm:$0xff]
    %v801 = vld [vmem:[#allocation6 + $0x1a8] sm:$0xff]
    %v802 = vld [vmem:[#allocation6 + $0x1b0] sm:$0xff]
    %v803 = vld [vmem:[#allocation6 + $0x1b8] sm:$0xff]
    %v804 = vld [vmem:[#allocation6 + $0x1c0] sm:$0xff]
    %v805 = vld [vmem:[#allocation6 + $0x1c8] sm:$0xff]
    %v806 = vld [vmem:[#allocation6 + $0x1d0] sm:$0xff]
    %v807 = vld [vmem:[#allocation6 + $0x1d8] sm:$0xff]
    %v808 = vld [vmem:[#allocation6 + $0x1e0] sm:$0xff]
    %v809 = vld [vmem:[#allocation6 + $0x1e8] sm:$0xff]
    %v810 = vld [vmem:[#allocation6 + $0x1f0] sm:$0xff]
    %v811 = vld [vmem:[#allocation6 + $0x1f8] sm:$0xff]
    %s812 = scalar_lea.vmem [#allocation3], 3
    %v813 = vld [vmem:[%s812] ss:$8 sm:$0xf]
    %v815 = vperm.slane %v813, 0
    %v816 = vperm.slane %v813, 1
    %v817 = vperm.slane %v813, 2
    %v818 = vperm.slane %v813, 3
    %823 = vmatpush.msra.mxu0 %v808
    %824 = vmatpush.msra.mxu0 %v804
    %825 = vmatpush.msra.mxu0 %v800
    %826 = vmatpush.msra.mxu0 %v796
    %827 = vmatpush.msra.mxu0 %v792
    %828 = vmatpush.msra.mxu0 %v788
    %829 = vmatpush.msra.mxu0 %v784
    %830 = vmatpush.msra.mxu0 %v780
    %831 = vmatpush.msra.mxu0 %v776
    %832 = vmatpush.msra.mxu0 %v772
    %833 = vmatpush.msra.mxu0 %v768
    %834 = vmatpush.msra.mxu0 %v764
    %835 = vmatpush.msra.mxu0 %v760
    %836 = vmatpush.msra.mxu0 %v756
    %837 = vmatpush.msra.mxu0 %v752
    %838 = vmatpush.msra.mxu0 %v748
    %839 = vmatmul.f32.gmra.mxu0 %v745
    %v840 = vpop.f32.mrf.mxu0
    %v841 = vadd.f32 %v815, %v840
    %842 = vdwg.mxu0
    %843 = vmatpush.msra.mxu0 %v809
    %844 = vmatpush.msra.mxu0 %v805
    %845 = vmatpush.msra.mxu0 %v801
    %846 = vmatpush.msra.mxu0 %v797
    %847 = vmatpush.msra.mxu0 %v793
    %848 = vmatpush.msra.mxu0 %v789
    %849 = vmatpush.msra.mxu0 %v785
    %850 = vmatpush.msra.mxu0 %v781
    %851 = vmatpush.msra.mxu0 %v777
    %852 = vmatpush.msra.mxu0 %v773
    %853 = vmatpush.msra.mxu0 %v769
    %854 = vmatpush.msra.mxu0 %v765
    %855 = vmatpush.msra.mxu0 %v761
    %856 = vmatpush.msra.mxu0 %v757
    %857 = vmatpush.msra.mxu0 %v753
    %858 = vmatpush.msra.mxu0 %v749
    %859 = vmatmul.f32.gmra.mxu0 %v745
    %v860 = vpop.f32.mrf.mxu0
    %v861 = vadd.f32 %v816, %v860
    %862 = vdwg.mxu0
    %863 = vmatpush.msra.mxu0 %v810
    %864 = vmatpush.msra.mxu0 %v806
    %865 = vmatpush.msra.mxu0 %v802
    %866 = vmatpush.msra.mxu0 %v798
    %867 = vmatpush.msra.mxu0 %v794
    %868 = vmatpush.msra.mxu0 %v790
    %869 = vmatpush.msra.mxu0 %v786
    %870 = vmatpush.msra.mxu0 %v782
    %871 = vmatpush.msra.mxu0 %v778
    %872 = vmatpush.msra.mxu0 %v774
    %873 = vmatpush.msra.mxu0 %v770
    %874 = vmatpush.msra.mxu0 %v766
    %875 = vmatpush.msra.mxu0 %v762
    %876 = vmatpush.msra.mxu0 %v758
    %877 = vmatpush.msra.mxu0 %v754
    %878 = vmatpush.msra.mxu0 %v750
    %879 = vmatmul.f32.gmra.mxu0 %v745
    %v880 = vpop.f32.mrf.mxu0
    %v881 = vadd.f32 %v817, %v880
    %882 = vdwg.mxu0
    %883 = vmatpush.msra.mxu0 %v811
    %884 = vmatpush.msra.mxu0 %v807
    %885 = vmatpush.msra.mxu0 %v803
    %886 = vmatpush.msra.mxu0 %v799
    %887 = vmatpush.msra.mxu0 %v795
    %888 = vmatpush.msra.mxu0 %v791
    %889 = vmatpush.msra.mxu0 %v787
    %890 = vmatpush.msra.mxu0 %v783
    %891 = vmatpush.msra.mxu0 %v779
    %892 = vmatpush.msra.mxu0 %v775
    %893 = vmatpush.msra.mxu0 %v771
    %894 = vmatpush.msra.mxu0 %v767
    %895 = vmatpush.msra.mxu0 %v763
    %896 = vmatpush.msra.mxu0 %v759
    %897 = vmatpush.msra.mxu0 %v755
    %898 = vmatpush.msra.mxu0 %v751
    %899 = vmatmul.f32.gmra.mxu0 %v745
    %v900 = vpop.f32.mrf.mxu0
    %v901 = vadd.f32 %v818, %v900
    %902 = vdwg.mxu0
    %v903 = vxor.u32 %v841, 2147483648
    %v904 = vxor.u32 %v861, 2147483648
    %v905 = vxor.u32 %v881, 2147483648
    %v906 = vmul.f32 %v903, 1.442695
    %v907 = vpow.pop %v906
    %v908 = vmul.f32 %v904, 1.442695
    %v909 = vpow.pop %v908
    %v910 = vmul.f32 %v905, 1.442695
    %v911 = vpow.pop %v910
    %v912 = vadd.f32 %v907, 1.0
    %v913 = vadd.f32 %v909, 1.0
    %v914 = vadd.f32 %v911, 1.0
    %v915 = vrcp.pop %v912
    %v916 = vmul.f32 %v912, %v915
    %v917 = vsub.f32 1.0, %v916
    %v918 = vmul.f32 %v915, %v917
    %v919 = vadd.f32 %v915, %v918
    %vm920 = vweird.f32 %v912
    %vm921 = vweird.f32 %v915
    %vm922 = vmor %vm920, %vm921
    %v923 = vsel %vm922, %v915, %v919
    %v924 = vand.u32 2147483647, %v912
    %vm925 = vcmp.eq.f32.partialorder %v924, 8.507059e+37
    %v926 = vand.u32 %v912, 2147483648
    %v927 = vor.u32 1.1754944e-38, %v926
    %v928 = vsel %vm925, %v927, %v923
    %v929 = vmul.f32 1.0, %v928
    %v930 = vrcp.pop %v913
    %v931 = vmul.f32 %v913, %v930
    %v932 = vsub.f32 1.0, %v931
    %v933 = vmul.f32 %v930, %v932
    %v934 = vadd.f32 %v930, %v933
    %vm935 = vweird.f32 %v913
    %vm936 = vweird.f32 %v930
    %vm937 = vmor %vm935, %vm936
    %v938 = vsel %vm937, %v930, %v934
    %v939 = vand.u32 2147483647, %v913
    %vm940 = vcmp.eq.f32.partialorder %v939, 8.507059e+37
    %v941 = vand.u32 %v913, 2147483648
    %v942 = vor.u32 1.1754944e-38, %v941
    %v943 = vsel %vm940, %v942, %v938
    %v944 = vmul.f32 1.0, %v943
    %v945 = vrcp.pop %v914
    %v946 = vmul.f32 %v914, %v945
    %v947 = vsub.f32 1.0, %v946
    %v948 = vmul.f32 %v945, %v947
    %v949 = vadd.f32 %v945, %v948
    %vm950 = vweird.f32 %v914
    %vm951 = vweird.f32 %v945
    %vm952 = vmor %vm950, %vm951
    %v953 = vsel %vm952, %v945, %v949
    %v954 = vand.u32 2147483647, %v914
    %vm955 = vcmp.eq.f32.partialorder %v954, 8.507059e+37
    %v956 = vand.u32 %v914, 2147483648
    %v957 = vor.u32 1.1754944e-38, %v956
    %v958 = vsel %vm955, %v957, %v953
    %v959 = vmul.f32 1.0, %v958
    %v960 = vtanh.pop %v901
    %v961 = vmul.f32 %v944, %v746
    %v962 = vmul.f32 %v929, %v960
    %v963 = vadd.f32 %v961, %v962
    %v964 = vtanh.pop %v963
    %v965 = vmul.f32 %v959, %v964
    %s966 = sadd.s32 %s288, 3
    %p967 = scmp.lt.s32.totalorder %s966, 1
    %s968 = scalar_select %p967, 1, 0
    %v969 = vstv %s968
    %vm970 = vcmp.eq.s32.totalorder %v969, 1
    %v971 = vsel %vm970, %v965, %v745
    %v972 = vsel %vm970, %v963, %v746
    %973 = vst [vmem:[#allocation9 + $0x3] sm:$0x1] %v971
    %v974 = vld [vmem:[#allocation6] sm:$0xff]
    %v975 = vld [vmem:[#allocation6 + $0x8] sm:$0xff]
    %v976 = vld [vmem:[#allocation6 + $0x10] sm:$0xff]
    %v977 = vld [vmem:[#allocation6 + $0x18] sm:$0xff]
    %v978 = vld [vmem:[#allocation6 + $0x20] sm:$0xff]
    %v979 = vld [vmem:[#allocation6 + $0x28] sm:$0xff]
    %v980 = vld [vmem:[#allocation6 + $0x30] sm:$0xff]
    %v981 = vld [vmem:[#allocation6 + $0x38] sm:$0xff]
    %v982 = vld [vmem:[#allocation6 + $0x40] sm:$0xff]
    %v983 = vld [vmem:[#allocation6 + $0x48] sm:$0xff]
    %v984 = vld [vmem:[#allocation6 + $0x50] sm:$0xff]
    %v985 = vld [vmem:[#allocation6 + $0x58] sm:$0xff]
    %v986 = vld [vmem:[#allocation6 + $0x60] sm:$0xff]
    %v987 = vld [vmem:[#allocation6 + $0x68] sm:$0xff]
    %v988 = vld [vmem:[#allocation6 + $0x70] sm:$0xff]
    %v989 = vld [vmem:[#allocation6 + $0x78] sm:$0xff]
    %v990 = vld [vmem:[#allocation6 + $0x80] sm:$0xff]
    %v991 = vld [vmem:[#allocation6 + $0x88] sm:$0xff]
    %v992 = vld [vmem:[#allocation6 + $0x90] sm:$0xff]
    %v993 = vld [vmem:[#allocation6 + $0x98] sm:$0xff]
    %v994 = vld [vmem:[#allocation6 + $0xa0] sm:$0xff]
    %v995 = vld [vmem:[#allocation6 + $0xa8] sm:$0xff]
    %v996 = vld [vmem:[#allocation6 + $0xb0] sm:$0xff]
    %v997 = vld [vmem:[#allocation6 + $0xb8] sm:$0xff]
    %v998 = vld [vmem:[#allocation6 + $0xc0] sm:$0xff]
    %v999 = vld [vmem:[#allocation6 + $0xc8] sm:$0xff]
    %v1000 = vld [vmem:[#allocation6 + $0xd0] sm:$0xff]
    %v1001 = vld [vmem:[#allocation6 + $0xd8] sm:$0xff]
    %v1002 = vld [vmem:[#allocation6 + $0xe0] sm:$0xff]
    %v1003 = vld [vmem:[#allocation6 + $0xe8] sm:$0xff]
    %v1004 = vld [vmem:[#allocation6 + $0xf0] sm:$0xff]
    %v1005 = vld [vmem:[#allocation6 + $0xf8] sm:$0xff]
    %v1006 = vld [vmem:[#allocation6 + $0x100] sm:$0xff]
    %v1007 = vld [vmem:[#allocation6 + $0x108] sm:$0xff]
    %v1008 = vld [vmem:[#allocation6 + $0x110] sm:$0xff]
    %v1009 = vld [vmem:[#allocation6 + $0x118] sm:$0xff]
    %v1010 = vld [vmem:[#allocation6 + $0x120] sm:$0xff]
    %v1011 = vld [vmem:[#allocation6 + $0x128] sm:$0xff]
    %v1012 = vld [vmem:[#allocation6 + $0x130] sm:$0xff]
    %v1013 = vld [vmem:[#allocation6 + $0x138] sm:$0xff]
    %v1014 = vld [vmem:[#allocation6 + $0x140] sm:$0xff]
    %v1015 = vld [vmem:[#allocation6 + $0x148] sm:$0xff]
    %v1016 = vld [vmem:[#allocation6 + $0x150] sm:$0xff]
    %v1017 = vld [vmem:[#allocation6 + $0x158] sm:$0xff]
    %v1018 = vld [vmem:[#allocation6 + $0x160] sm:$0xff]
    %v1019 = vld [vmem:[#allocation6 + $0x168] sm:$0xff]
    %v1020 = vld [vmem:[#allocation6 + $0x170] sm:$0xff]
    %v1021 = vld [vmem:[#allocation6 + $0x178] sm:$0xff]
    %v1022 = vld [vmem:[#allocation6 + $0x180] sm:$0xff]
    %v1023 = vld [vmem:[#allocation6 + $0x188] sm:$0xff]
    %v1024 = vld [vmem:[#allocation6 + $0x190] sm:$0xff]
    %v1025 = vld [vmem:[#allocation6 + $0x198] sm:$0xff]
    %v1026 = vld [vmem:[#allocation6 + $0x1a0] sm:$0xff]
    %v1027 = vld [vmem:[#allocation6 + $0x1a8] sm:$0xff]
    %v1028 = vld [vmem:[#allocation6 + $0x1b0] sm:$0xff]
    %v1029 = vld [vmem:[#allocation6 + $0x1b8] sm:$0xff]
    %v1030 = vld [vmem:[#allocation6 + $0x1c0] sm:$0xff]
    %v1031 = vld [vmem:[#allocation6 + $0x1c8] sm:$0xff]
    %v1032 = vld [vmem:[#allocation6 + $0x1d0] sm:$0xff]
    %v1033 = vld [vmem:[#allocation6 + $0x1d8] sm:$0xff]
    %v1034 = vld [vmem:[#allocation6 + $0x1e0] sm:$0xff]
    %v1035 = vld [vmem:[#allocation6 + $0x1e8] sm:$0xff]
    %v1036 = vld [vmem:[#allocation6 + $0x1f0] sm:$0xff]
    %v1037 = vld [vmem:[#allocation6 + $0x1f8] sm:$0xff]
    %s1038 = scalar_lea.vmem [#allocation3], 4
    %v1039 = vld [vmem:[%s1038] ss:$8 sm:$0xf]
    %v1041 = vperm.slane %v1039, 0
    %v1042 = vperm.slane %v1039, 1
    %v1043 = vperm.slane %v1039, 2
    %v1044 = vperm.slane %v1039, 3
    %1049 = vmatpush.msra.mxu0 %v1034
    %1050 = vmatpush.msra.mxu0 %v1030
    %1051 = vmatpush.msra.mxu0 %v1026
    %1052 = vmatpush.msra.mxu0 %v1022
    %1053 = vmatpush.msra.mxu0 %v1018
    %1054 = vmatpush.msra.mxu0 %v1014
    %1055 = vmatpush.msra.mxu0 %v1010
    %1056 = vmatpush.msra.mxu0 %v1006
    %1057 = vmatpush.msra.mxu0 %v1002
    %1058 = vmatpush.msra.mxu0 %v998
    %1059 = vmatpush.msra.mxu0 %v994
    %1060 = vmatpush.msra.mxu0 %v990
    %1061 = vmatpush.msra.mxu0 %v986
    %1062 = vmatpush.msra.mxu0 %v982
    %1063 = vmatpush.msra.mxu0 %v978
    %1064 = vmatpush.msra.mxu0 %v974
    %1065 = vmatmul.f32.gmra.mxu0 %v971
    %v1066 = vpop.f32.mrf.mxu0
    %v1067 = vadd.f32 %v1041, %v1066
    %1068 = vdwg.mxu0
    %1069 = vmatpush.msra.mxu0 %v1035
    %1070 = vmatpush.msra.mxu0 %v1031
    %1071 = vmatpush.msra.mxu0 %v1027
    %1072 = vmatpush.msra.mxu0 %v1023
    %1073 = vmatpush.msra.mxu0 %v1019
    %1074 = vmatpush.msra.mxu0 %v1015
    %1075 = vmatpush.msra.mxu0 %v1011
    %1076 = vmatpush.msra.mxu0 %v1007
    %1077 = vmatpush.msra.mxu0 %v1003
    %1078 = vmatpush.msra.mxu0 %v999
    %1079 = vmatpush.msra.mxu0 %v995
    %1080 = vmatpush.msra.mxu0 %v991
    %1081 = vmatpush.msra.mxu0 %v987
    %1082 = vmatpush.msra.mxu0 %v983
    %1083 = vmatpush.msra.mxu0 %v979
    %1084 = vmatpush.msra.mxu0 %v975
    %1085 = vmatmul.f32.gmra.mxu0 %v971
    %v1086 = vpop.f32.mrf.mxu0
    %v1087 = vadd.f32 %v1042, %v1086
    %1088 = vdwg.mxu0
    %1089 = vmatpush.msra.mxu0 %v1036
    %1090 = vmatpush.msra.mxu0 %v1032
    %1091 = vmatpush.msra.mxu0 %v1028
    %1092 = vmatpush.msra.mxu0 %v1024
    %1093 = vmatpush.msra.mxu0 %v1020
    %1094 = vmatpush.msra.mxu0 %v1016
    %1095 = vmatpush.msra.mxu0 %v1012
    %1096 = vmatpush.msra.mxu0 %v1008
    %1097 = vmatpush.msra.mxu0 %v1004
    %1098 = vmatpush.msra.mxu0 %v1000
    %1099 = vmatpush.msra.mxu0 %v996
    %1100 = vmatpush.msra.mxu0 %v992
    %1101 = vmatpush.msra.mxu0 %v988
    %1102 = vmatpush.msra.mxu0 %v984
    %1103 = vmatpush.msra.mxu0 %v980
    %1104 = vmatpush.msra.mxu0 %v976
    %1105 = vmatmul.f32.gmra.mxu0 %v971
    %v1106 = vpop.f32.mrf.mxu0
    %v1107 = vadd.f32 %v1043, %v1106
    %1108 = vdwg.mxu0
    %1109 = vmatpush.msra.mxu0 %v1037
    %1110 = vmatpush.msra.mxu0 %v1033
    %1111 = vmatpush.msra.mxu0 %v1029
    %1112 = vmatpush.msra.mxu0 %v1025
    %1113 = vmatpush.msra.mxu0 %v1021
    %1114 = vmatpush.msra.mxu0 %v1017
    %1115 = vmatpush.msra.mxu0 %v1013
    %1116 = vmatpush.msra.mxu0 %v1009
    %1117 = vmatpush.msra.mxu0 %v1005
    %1118 = vmatpush.msra.mxu0 %v1001
    %1119 = vmatpush.msra.mxu0 %v997
    %1120 = vmatpush.msra.mxu0 %v993
    %1121 = vmatpush.msra.mxu0 %v989
    %1122 = vmatpush.msra.mxu0 %v985
    %1123 = vmatpush.msra.mxu0 %v981
    %1124 = vmatpush.msra.mxu0 %v977
    %1125 = vmatmul.f32.gmra.mxu0 %v971
    %v1126 = vpop.f32.mrf.mxu0
    %v1127 = vadd.f32 %v1044, %v1126
    %1128 = vdwg.mxu0
    %v1129 = vxor.u32 %v1067, 2147483648
    %v1130 = vxor.u32 %v1087, 2147483648
    %v1131 = vxor.u32 %v1107, 2147483648
    %v1132 = vmul.f32 %v1129, 1.442695
    %v1133 = vpow.pop %v1132
    %v1134 = vmul.f32 %v1130, 1.442695
    %v1135 = vpow.pop %v1134
    %v1136 = vmul.f32 %v1131, 1.442695
    %v1137 = vpow.pop %v1136
    %v1138 = vadd.f32 %v1133, 1.0
    %v1139 = vadd.f32 %v1135, 1.0
    %v1140 = vadd.f32 %v1137, 1.0
    %v1141 = vrcp.pop %v1138
    %v1142 = vmul.f32 %v1138, %v1141
    %v1143 = vsub.f32 1.0, %v1142
    %v1144 = vmul.f32 %v1141, %v1143
    %v1145 = vadd.f32 %v1141, %v1144
    %vm1146 = vweird.f32 %v1138
    %vm1147 = vweird.f32 %v1141
    %vm1148 = vmor %vm1146, %vm1147
    %v1149 = vsel %vm1148, %v1141, %v1145
    %v1150 = vand.u32 2147483647, %v1138
    %vm1151 = vcmp.eq.f32.partialorder %v1150, 8.507059e+37
    %v1152 = vand.u32 %v1138, 2147483648
    %v1153 = vor.u32 1.1754944e-38, %v1152
    %v1154 = vsel %vm1151, %v1153, %v1149
    %v1155 = vmul.f32 1.0, %v1154
    %v1156 = vrcp.pop %v1139
    %v1157 = vmul.f32 %v1139, %v1156
    %v1158 = vsub.f32 1.0, %v1157
    %v1159 = vmul.f32 %v1156, %v1158
    %v1160 = vadd.f32 %v1156, %v1159
    %vm1161 = vweird.f32 %v1139
    %vm1162 = vweird.f32 %v1156
    %vm1163 = vmor %vm1161, %vm1162
    %v1164 = vsel %vm1163, %v1156, %v1160
    %v1165 = vand.u32 2147483647, %v1139
    %vm1166 = vcmp.eq.f32.partialorder %v1165, 8.507059e+37
    %v1167 = vand.u32 %v1139, 2147483648
    %v1168 = vor.u32 1.1754944e-38, %v1167
    %v1169 = vsel %vm1166, %v1168, %v1164
    %v1170 = vmul.f32 1.0, %v1169
    %v1171 = vrcp.pop %v1140
    %v1172 = vmul.f32 %v1140, %v1171
    %v1173 = vsub.f32 1.0, %v1172
    %v1174 = vmul.f32 %v1171, %v1173
    %v1175 = vadd.f32 %v1171, %v1174
    %vm1176 = vweird.f32 %v1140
    %vm1177 = vweird.f32 %v1171
    %vm1178 = vmor %vm1176, %vm1177
    %v1179 = vsel %vm1178, %v1171, %v1175
    %v1180 = vand.u32 2147483647, %v1140
    %vm1181 = vcmp.eq.f32.partialorder %v1180, 8.507059e+37
    %v1182 = vand.u32 %v1140, 2147483648
    %v1183 = vor.u32 1.1754944e-38, %v1182
    %v1184 = vsel %vm1181, %v1183, %v1179
    %v1185 = vmul.f32 1.0, %v1184
    %v1186 = vtanh.pop %v1127
    %v1187 = vmul.f32 %v1170, %v972
    %v1188 = vmul.f32 %v1155, %v1186
    %v1189 = vadd.f32 %v1187, %v1188
    %v1190 = vtanh.pop %v1189
    %v1191 = vmul.f32 %v1185, %v1190
    %s1192 = sadd.s32 %s288, 4
    %p1193 = scmp.lt.s32.totalorder %s1192, 1
    %s1194 = scalar_select %p1193, 1, 0
    %v1195 = vstv %s1194
    %vm1196 = vcmp.eq.s32.totalorder %v1195, 1
    %v1197 = vsel %vm1196, %v1191, %v971
    %v1198 = vsel %vm1196, %v1189, %v972
    %1199 = vst [vmem:[#allocation9 + $0x4] sm:$0x1] %v1197
    %v1200 = vld [vmem:[#allocation6] sm:$0xff]
    %v1201 = vld [vmem:[#allocation6 + $0x8] sm:$0xff]
    %v1202 = vld [vmem:[#allocation6 + $0x10] sm:$0xff]
    %v1203 = vld [vmem:[#allocation6 + $0x18] sm:$0xff]
    %v1204 = vld [vmem:[#allocation6 + $0x20] sm:$0xff]
    %v1205 = vld [vmem:[#allocation6 + $0x28] sm:$0xff]
    %v1206 = vld [vmem:[#allocation6 + $0x30] sm:$0xff]
    %v1207 = vld [vmem:[#allocation6 + $0x38] sm:$0xff]
    %v1208 = vld [vmem:[#allocation6 + $0x40] sm:$0xff]
    %v1209 = vld [vmem:[#allocation6 + $0x48] sm:$0xff]
    %v1210 = vld [vmem:[#allocation6 + $0x50] sm:$0xff]
    %v1211 = vld [vmem:[#allocation6 + $0x58] sm:$0xff]
    %v1212 = vld [vmem:[#allocation6 + $0x60] sm:$0xff]
    %v1213 = vld [vmem:[#allocation6 + $0x68] sm:$0xff]
    %v1214 = vld [vmem:[#allocation6 + $0x70] sm:$0xff]
    %v1215 = vld [vmem:[#allocation6 + $0x78] sm:$0xff]
    %v1216 = vld [vmem:[#allocation6 + $0x80] sm:$0xff]
    %v1217 = vld [vmem:[#allocation6 + $0x88] sm:$0xff]
    %v1218 = vld [vmem:[#allocation6 + $0x90] sm:$0xff]
    %v1219 = vld [vmem:[#allocation6 + $0x98] sm:$0xff]
    %v1220 = vld [vmem:[#allocation6 + $0xa0] sm:$0xff]
    %v1221 = vld [vmem:[#allocation6 + $0xa8] sm:$0xff]
    %v1222 = vld [vmem:[#allocation6 + $0xb0] sm:$0xff]
    %v1223 = vld [vmem:[#allocation6 + $0xb8] sm:$0xff]
    %v1224 = vld [vmem:[#allocation6 + $0xc0] sm:$0xff]
    %v1225 = vld [vmem:[#allocation6 + $0xc8] sm:$0xff]
    %v1226 = vld [vmem:[#allocation6 + $0xd0] sm:$0xff]
    %v1227 = vld [vmem:[#allocation6 + $0xd8] sm:$0xff]
    %v1228 = vld [vmem:[#allocation6 + $0xe0] sm:$0xff]
    %v1229 = vld [vmem:[#allocation6 + $0xe8] sm:$0xff]
    %v1230 = vld [vmem:[#allocation6 + $0xf0] sm:$0xff]
    %v1231 = vld [vmem:[#allocation6 + $0xf8] sm:$0xff]
    %v1232 = vld [vmem:[#allocation6 + $0x100] sm:$0xff]
    %v1233 = vld [vmem:[#allocation6 + $0x108] sm:$0xff]
    %v1234 = vld [vmem:[#allocation6 + $0x110] sm:$0xff]
    %v1235 = vld [vmem:[#allocation6 + $0x118] sm:$0xff]
    %v1236 = vld [vmem:[#allocation6 + $0x120] sm:$0xff]
    %v1237 = vld [vmem:[#allocation6 + $0x128] sm:$0xff]
    %v1238 = vld [vmem:[#allocation6 + $0x130] sm:$0xff]
    %v1239 = vld [vmem:[#allocation6 + $0x138] sm:$0xff]
    %v1240 = vld [vmem:[#allocation6 + $0x140] sm:$0xff]
    %v1241 = vld [vmem:[#allocation6 + $0x148] sm:$0xff]
    %v1242 = vld [vmem:[#allocation6 + $0x150] sm:$0xff]
    %v1243 = vld [vmem:[#allocation6 + $0x158] sm:$0xff]
    %v1244 = vld [vmem:[#allocation6 + $0x160] sm:$0xff]
    %v1245 = vld [vmem:[#allocation6 + $0x168] sm:$0xff]
    %v1246 = vld [vmem:[#allocation6 + $0x170] sm:$0xff]
    %v1247 = vld [vmem:[#allocation6 + $0x178] sm:$0xff]
    %v1248 = vld [vmem:[#allocation6 + $0x180] sm:$0xff]
    %v1249 = vld [vmem:[#allocation6 + $0x188] sm:$0xff]
    %v1250 = vld [vmem:[#allocation6 + $0x190] sm:$0xff]
    %v1251 = vld [vmem:[#allocation6 + $0x198] sm:$0xff]
    %v1252 = vld [vmem:[#allocation6 + $0x1a0] sm:$0xff]
    %v1253 = vld [vmem:[#allocation6 + $0x1a8] sm:$0xff]
    %v1254 = vld [vmem:[#allocation6 + $0x1b0] sm:$0xff]
    %v1255 = vld [vmem:[#allocation6 + $0x1b8] sm:$0xff]
    %v1256 = vld [vmem:[#allocation6 + $0x1c0] sm:$0xff]
    %v1257 = vld [vmem:[#allocation6 + $0x1c8] sm:$0xff]
    %v1258 = vld [vmem:[#allocation6 + $0x1d0] sm:$0xff]
    %v1259 = vld [vmem:[#allocation6 + $0x1d8] sm:$0xff]
    %v1260 = vld [vmem:[#allocation6 + $0x1e0] sm:$0xff]
    %v1261 = vld [vmem:[#allocation6 + $0x1e8] sm:$0xff]
    %v1262 = vld [vmem:[#allocation6 + $0x1f0] sm:$0xff]
    %v1263 = vld [vmem:[#allocation6 + $0x1f8] sm:$0xff]
    %s1264 = scalar_lea.vmem [#allocation3], 5
    %v1265 = vld [vmem:[%s1264] ss:$8 sm:$0xf]
    %v1267 = vperm.slane %v1265, 0
    %v1268 = vperm.slane %v1265, 1
    %v1269 = vperm.slane %v1265, 2
    %v1270 = vperm.slane %v1265, 3
    %1275 = vmatpush.msra.mxu0 %v1260
    %1276 = vmatpush.msra.mxu0 %v1256
    %1277 = vmatpush.msra.mxu0 %v1252
    %1278 = vmatpush.msra.mxu0 %v1248
    %1279 = vmatpush.msra.mxu0 %v1244
    %1280 = vmatpush.msra.mxu0 %v1240
    %1281 = vmatpush.msra.mxu0 %v1236
    %1282 = vmatpush.msra.mxu0 %v1232
    %1283 = vmatpush.msra.mxu0 %v1228
    %1284 = vmatpush.msra.mxu0 %v1224
    %1285 = vmatpush.msra.mxu0 %v1220
    %1286 = vmatpush.msra.mxu0 %v1216
    %1287 = vmatpush.msra.mxu0 %v1212
    %1288 = vmatpush.msra.mxu0 %v1208
    %1289 = vmatpush.msra.mxu0 %v1204
    %1290 = vmatpush.msra.mxu0 %v1200
    %1291 = vmatmul.f32.gmra.mxu0 %v1197
    %v1292 = vpop.f32.mrf.mxu0
    %v1293 = vadd.f32 %v1267, %v1292
    %1294 = vdwg.mxu0
    %1295 = vmatpush.msra.mxu0 %v1261
    %1296 = vmatpush.msra.mxu0 %v1257
    %1297 = vmatpush.msra.mxu0 %v1253
    %1298 = vmatpush.msra.mxu0 %v1249
    %1299 = vmatpush.msra.mxu0 %v1245
    %1300 = vmatpush.msra.mxu0 %v1241
    %1301 = vmatpush.msra.mxu0 %v1237
    %1302 = vmatpush.msra.mxu0 %v1233
    %1303 = vmatpush.msra.mxu0 %v1229
    %1304 = vmatpush.msra.mxu0 %v1225
    %1305 = vmatpush.msra.mxu0 %v1221
    %1306 = vmatpush.msra.mxu0 %v1217
    %1307 = vmatpush.msra.mxu0 %v1213
    %1308 = vmatpush.msra.mxu0 %v1209
    %1309 = vmatpush.msra.mxu0 %v1205
    %1310 = vmatpush.msra.mxu0 %v1201
    %1311 = vmatmul.f32.gmra.mxu0 %v1197
    %v1312 = vpop.f32.mrf.mxu0
    %v1313 = vadd.f32 %v1268, %v1312
    %1314 = vdwg.mxu0
    %1315 = vmatpush.msra.mxu0 %v1262
    %1316 = vmatpush.msra.mxu0 %v1258
    %1317 = vmatpush.msra.mxu0 %v1254
    %1318 = vmatpush.msra.mxu0 %v1250
    %1319 = vmatpush.msra.mxu0 %v1246
    %1320 = vmatpush.msra.mxu0 %v1242
    %1321 = vmatpush.msra.mxu0 %v1238
    %1322 = vmatpush.msra.mxu0 %v1234
    %1323 = vmatpush.msra.mxu0 %v1230
    %1324 = vmatpush.msra.mxu0 %v1226
    %1325 = vmatpush.msra.mxu0 %v1222
    %1326 = vmatpush.msra.mxu0 %v1218
    %1327 = vmatpush.msra.mxu0 %v1214
    %1328 = vmatpush.msra.mxu0 %v1210
    %1329 = vmatpush.msra.mxu0 %v1206
    %1330 = vmatpush.msra.mxu0 %v1202
    %1331 = vmatmul.f32.gmra.mxu0 %v1197
    %v1332 = vpop.f32.mrf.mxu0
    %v1333 = vadd.f32 %v1269, %v1332
    %1334 = vdwg.mxu0
    %1335 = vmatpush.msra.mxu0 %v1263
    %1336 = vmatpush.msra.mxu0 %v1259
    %1337 = vmatpush.msra.mxu0 %v1255
    %1338 = vmatpush.msra.mxu0 %v1251
    %1339 = vmatpush.msra.mxu0 %v1247
    %1340 = vmatpush.msra.mxu0 %v1243
    %1341 = vmatpush.msra.mxu0 %v1239
    %1342 = vmatpush.msra.mxu0 %v1235
    %1343 = vmatpush.msra.mxu0 %v1231
    %1344 = vmatpush.msra.mxu0 %v1227
    %1345 = vmatpush.msra.mxu0 %v1223
    %1346 = vmatpush.msra.mxu0 %v1219
    %1347 = vmatpush.msra.mxu0 %v1215
    %1348 = vmatpush.msra.mxu0 %v1211
    %1349 = vmatpush.msra.mxu0 %v1207
    %1350 = vmatpush.msra.mxu0 %v1203
    %1351 = vmatmul.f32.gmra.mxu0 %v1197
    %v1352 = vpop.f32.mrf.mxu0
    %v1353 = vadd.f32 %v1270, %v1352
    %1354 = vdwg.mxu0
    %v1355 = vxor.u32 %v1293, 2147483648
    %v1356 = vxor.u32 %v1313, 2147483648
    %v1357 = vxor.u32 %v1333, 2147483648
    %v1358 = vmul.f32 %v1355, 1.442695
    %v1359 = vpow.pop %v1358
    %v1360 = vmul.f32 %v1356, 1.442695
    %v1361 = vpow.pop %v1360
    %v1362 = vmul.f32 %v1357, 1.442695
    %v1363 = vpow.pop %v1362
    %v1364 = vadd.f32 %v1359, 1.0
    %v1365 = vadd.f32 %v1361, 1.0
    %v1366 = vadd.f32 %v1363, 1.0
    %v1367 = vrcp.pop %v1364
    %v1368 = vmul.f32 %v1364, %v1367
    %v1369 = vsub.f32 1.0, %v1368
    %v1370 = vmul.f32 %v1367, %v1369
    %v1371 = vadd.f32 %v1367, %v1370
    %vm1372 = vweird.f32 %v1364
    %vm1373 = vweird.f32 %v1367
    %vm1374 = vmor %vm1372, %vm1373
    %v1375 = vsel %vm1374, %v1367, %v1371
    %v1376 = vand.u32 2147483647, %v1364
    %vm1377 = vcmp.eq.f32.partialorder %v1376, 8.507059e+37
    %v1378 = vand.u32 %v1364, 2147483648
    %v1379 = vor.u32 1.1754944e-38, %v1378
    %v1380 = vsel %vm1377, %v1379, %v1375
    %v1381 = vmul.f32 1.0, %v1380
    %v1382 = vrcp.pop %v1365
    %v1383 = vmul.f32 %v1365, %v1382
    %v1384 = vsub.f32 1.0, %v1383
    %v1385 = vmul.f32 %v1382, %v1384
    %v1386 = vadd.f32 %v1382, %v1385
    %vm1387 = vweird.f32 %v1365
    %vm1388 = vweird.f32 %v1382
    %vm1389 = vmor %vm1387, %vm1388
    %v1390 = vsel %vm1389, %v1382, %v1386
    %v1391 = vand.u32 2147483647, %v1365
    %vm1392 = vcmp.eq.f32.partialorder %v1391, 8.507059e+37
    %v1393 = vand.u32 %v1365, 2147483648
    %v1394 = vor.u32 1.1754944e-38, %v1393
    %v1395 = vsel %vm1392, %v1394, %v1390
    %v1396 = vmul.f32 1.0, %v1395
    %v1397 = vrcp.pop %v1366
    %v1398 = vmul.f32 %v1366, %v1397
    %v1399 = vsub.f32 1.0, %v1398
    %v1400 = vmul.f32 %v1397, %v1399
    %v1401 = vadd.f32 %v1397, %v1400
    %vm1402 = vweird.f32 %v1366
    %vm1403 = vweird.f32 %v1397
    %vm1404 = vmor %vm1402, %vm1403
    %v1405 = vsel %vm1404, %v1397, %v1401
    %v1406 = vand.u32 2147483647, %v1366
    %vm1407 = vcmp.eq.f32.partialorder %v1406, 8.507059e+37
    %v1408 = vand.u32 %v1366, 2147483648
    %v1409 = vor.u32 1.1754944e-38, %v1408
    %v1410 = vsel %vm1407, %v1409, %v1405
    %v1411 = vmul.f32 1.0, %v1410
    %v1412 = vtanh.pop %v1353
    %v1413 = vmul.f32 %v1396, %v1198
    %v1414 = vmul.f32 %v1381, %v1412
    %v1415 = vadd.f32 %v1413, %v1414
    %v1416 = vtanh.pop %v1415
    %v1417 = vmul.f32 %v1411, %v1416
    %s1418 = sadd.s32 %s288, 5
    %p1419 = scmp.lt.s32.totalorder %s1418, 1
    %s1420 = scalar_select %p1419, 1, 0
    %v1421 = vstv %s1420
    %vm1422 = vcmp.eq.s32.totalorder %v1421, 1
    %v1423 = vsel %vm1422, %v1417, %v1197
    %v1424 = vsel %vm1422, %v1415, %v1198
    %1425 = vst [vmem:[#allocation9 + $0x5] sm:$0x1] %v1423
    %v1426 = vld [vmem:[#allocation6] sm:$0xff]
    %v1427 = vld [vmem:[#allocation6 + $0x8] sm:$0xff]
    %v1428 = vld [vmem:[#allocation6 + $0x10] sm:$0xff]
    %v1429 = vld [vmem:[#allocation6 + $0x18] sm:$0xff]
    %v1430 = vld [vmem:[#allocation6 + $0x20] sm:$0xff]
    %v1431 = vld [vmem:[#allocation6 + $0x28] sm:$0xff]
    %v1432 = vld [vmem:[#allocation6 + $0x30] sm:$0xff]
    %v1433 = vld [vmem:[#allocation6 + $0x38] sm:$0xff]
    %v1434 = vld [vmem:[#allocation6 + $0x40] sm:$0xff]
    %v1435 = vld [vmem:[#allocation6 + $0x48] sm:$0xff]
    %v1436 = vld [vmem:[#allocation6 + $0x50] sm:$0xff]
    %v1437 = vld [vmem:[#allocation6 + $0x58] sm:$0xff]
    %v1438 = vld [vmem:[#allocation6 + $0x60] sm:$0xff]
    %v1439 = vld [vmem:[#allocation6 + $0x68] sm:$0xff]
    %v1440 = vld [vmem:[#allocation6 + $0x70] sm:$0xff]
    %v1441 = vld [vmem:[#allocation6 + $0x78] sm:$0xff]
    %v1442 = vld [vmem:[#allocation6 + $0x80] sm:$0xff]
    %v1443 = vld [vmem:[#allocation6 + $0x88] sm:$0xff]
    %v1444 = vld [vmem:[#allocation6 + $0x90] sm:$0xff]
    %v1445 = vld [vmem:[#allocation6 + $0x98] sm:$0xff]
    %v1446 = vld [vmem:[#allocation6 + $0xa0] sm:$0xff]
    %v1447 = vld [vmem:[#allocation6 + $0xa8] sm:$0xff]
    %v1448 = vld [vmem:[#allocation6 + $0xb0] sm:$0xff]
    %v1449 = vld [vmem:[#allocation6 + $0xb8] sm:$0xff]
    %v1450 = vld [vmem:[#allocation6 + $0xc0] sm:$0xff]
    %v1451 = vld [vmem:[#allocation6 + $0xc8] sm:$0xff]
    %v1452 = vld [vmem:[#allocation6 + $0xd0] sm:$0xff]
    %v1453 = vld [vmem:[#allocation6 + $0xd8] sm:$0xff]
    %v1454 = vld [vmem:[#allocation6 + $0xe0] sm:$0xff]
    %v1455 = vld [vmem:[#allocation6 + $0xe8] sm:$0xff]
    %v1456 = vld [vmem:[#allocation6 + $0xf0] sm:$0xff]
    %v1457 = vld [vmem:[#allocation6 + $0xf8] sm:$0xff]
    %v1458 = vld [vmem:[#allocation6 + $0x100] sm:$0xff]
    %v1459 = vld [vmem:[#allocation6 + $0x108] sm:$0xff]
    %v1460 = vld [vmem:[#allocation6 + $0x110] sm:$0xff]
    %v1461 = vld [vmem:[#allocation6 + $0x118] sm:$0xff]
    %v1462 = vld [vmem:[#allocation6 + $0x120] sm:$0xff]
    %v1463 = vld [vmem:[#allocation6 + $0x128] sm:$0xff]
    %v1464 = vld [vmem:[#allocation6 + $0x130] sm:$0xff]
    %v1465 = vld [vmem:[#allocation6 + $0x138] sm:$0xff]
    %v1466 = vld [vmem:[#allocation6 + $0x140] sm:$0xff]
    %v1467 = vld [vmem:[#allocation6 + $0x148] sm:$0xff]
    %v1468 = vld [vmem:[#allocation6 + $0x150] sm:$0xff]
    %v1469 = vld [vmem:[#allocation6 + $0x158] sm:$0xff]
    %v1470 = vld [vmem:[#allocation6 + $0x160] sm:$0xff]
    %v1471 = vld [vmem:[#allocation6 + $0x168] sm:$0xff]
    %v1472 = vld [vmem:[#allocation6 + $0x170] sm:$0xff]
    %v1473 = vld [vmem:[#allocation6 + $0x178] sm:$0xff]
    %v1474 = vld [vmem:[#allocation6 + $0x180] sm:$0xff]
    %v1475 = vld [vmem:[#allocation6 + $0x188] sm:$0xff]
    %v1476 = vld [vmem:[#allocation6 + $0x190] sm:$0xff]
    %v1477 = vld [vmem:[#allocation6 + $0x198] sm:$0xff]
    %v1478 = vld [vmem:[#allocation6 + $0x1a0] sm:$0xff]
    %v1479 = vld [vmem:[#allocation6 + $0x1a8] sm:$0xff]
    %v1480 = vld [vmem:[#allocation6 + $0x1b0] sm:$0xff]
    %v1481 = vld [vmem:[#allocation6 + $0x1b8] sm:$0xff]
    %v1482 = vld [vmem:[#allocation6 + $0x1c0] sm:$0xff]
    %v1483 = vld [vmem:[#allocation6 + $0x1c8] sm:$0xff]
    %v1484 = vld [vmem:[#allocation6 + $0x1d0] sm:$0xff]
    %v1485 = vld [vmem:[#allocation6 + $0x1d8] sm:$0xff]
    %v1486 = vld [vmem:[#allocation6 + $0x1e0] sm:$0xff]
    %v1487 = vld [vmem:[#allocation6 + $0x1e8] sm:$0xff]
    %v1488 = vld [vmem:[#allocation6 + $0x1f0] sm:$0xff]
    %v1489 = vld [vmem:[#allocation6 + $0x1f8] sm:$0xff]
    %s1490 = scalar_lea.vmem [#allocation3], 6
    %v1491 = vld [vmem:[%s1490] ss:$8 sm:$0xf]
    %v1493 = vperm.slane %v1491, 0
    %v1494 = vperm.slane %v1491, 1
    %v1495 = vperm.slane %v1491, 2
    %v1496 = vperm.slane %v1491, 3
    %1501 = vmatpush.msra.mxu0 %v1486
    %1502 = vmatpush.msra.mxu0 %v1482
    %1503 = vmatpush.msra.mxu0 %v1478
    %1504 = vmatpush.msra.mxu0 %v1474
    %1505 = vmatpush.msra.mxu0 %v1470
    %1506 = vmatpush.msra.mxu0 %v1466
    %1507 = vmatpush.msra.mxu0 %v1462
    %1508 = vmatpush.msra.mxu0 %v1458
    %1509 = vmatpush.msra.mxu0 %v1454
    %1510 = vmatpush.msra.mxu0 %v1450
    %1511 = vmatpush.msra.mxu0 %v1446
    %1512 = vmatpush.msra.mxu0 %v1442
    %1513 = vmatpush.msra.mxu0 %v1438
    %1514 = vmatpush.msra.mxu0 %v1434
    %1515 = vmatpush.msra.mxu0 %v1430
    %1516 = vmatpush.msra.mxu0 %v1426
    %1517 = vmatmul.f32.gmra.mxu0 %v1423
    %v1518 = vpop.f32.mrf.mxu0
    %v1519 = vadd.f32 %v1493, %v1518
    %1520 = vdwg.mxu0
    %1521 = vmatpush.msra.mxu0 %v1487
    %1522 = vmatpush.msra.mxu0 %v1483
    %1523 = vmatpush.msra.mxu0 %v1479
    %1524 = vmatpush.msra.mxu0 %v1475
    %1525 = vmatpush.msra.mxu0 %v1471
    %1526 = vmatpush.msra.mxu0 %v1467
    %1527 = vmatpush.msra.mxu0 %v1463
    %1528 = vmatpush.msra.mxu0 %v1459
    %1529 = vmatpush.msra.mxu0 %v1455
    %1530 = vmatpush.msra.mxu0 %v1451
    %1531 = vmatpush.msra.mxu0 %v1447
    %1532 = vmatpush.msra.mxu0 %v1443
    %1533 = vmatpush.msra.mxu0 %v1439
    %1534 = vmatpush.msra.mxu0 %v1435
    %1535 = vmatpush.msra.mxu0 %v1431
    %1536 = vmatpush.msra.mxu0 %v1427
    %1537 = vmatmul.f32.gmra.mxu0 %v1423
    %v1538 = vpop.f32.mrf.mxu0
    %v1539 = vadd.f32 %v1494, %v1538
    %1540 = vdwg.mxu0
    %1541 = vmatpush.msra.mxu0 %v1488
    %1542 = vmatpush.msra.mxu0 %v1484
    %1543 = vmatpush.msra.mxu0 %v1480
    %1544 = vmatpush.msra.mxu0 %v1476
    %1545 = vmatpush.msra.mxu0 %v1472
    %1546 = vmatpush.msra.mxu0 %v1468
    %1547 = vmatpush.msra.mxu0 %v1464
    %1548 = vmatpush.msra.mxu0 %v1460
    %1549 = vmatpush.msra.mxu0 %v1456
    %1550 = vmatpush.msra.mxu0 %v1452
    %1551 = vmatpush.msra.mxu0 %v1448
    %1552 = vmatpush.msra.mxu0 %v1444
    %1553 = vmatpush.msra.mxu0 %v1440
    %1554 = vmatpush.msra.mxu0 %v1436
    %1555 = vmatpush.msra.mxu0 %v1432
    %1556 = vmatpush.msra.mxu0 %v1428
    %1557 = vmatmul.f32.gmra.mxu0 %v1423
    %v1558 = vpop.f32.mrf.mxu0
    %v1559 = vadd.f32 %v1495, %v1558
    %1560 = vdwg.mxu0
    %1561 = vmatpush.msra.mxu0 %v1489
    %1562 = vmatpush.msra.mxu0 %v1485
    %1563 = vmatpush.msra.mxu0 %v1481
    %1564 = vmatpush.msra.mxu0 %v1477
    %1565 = vmatpush.msra.mxu0 %v1473
    %1566 = vmatpush.msra.mxu0 %v1469
    %1567 = vmatpush.msra.mxu0 %v1465
    %1568 = vmatpush.msra.mxu0 %v1461
    %1569 = vmatpush.msra.mxu0 %v1457
    %1570 = vmatpush.msra.mxu0 %v1453
    %1571 = vmatpush.msra.mxu0 %v1449
    %1572 = vmatpush.msra.mxu0 %v1445
    %1573 = vmatpush.msra.mxu0 %v1441
    %1574 = vmatpush.msra.mxu0 %v1437
    %1575 = vmatpush.msra.mxu0 %v1433
    %1576 = vmatpush.msra.mxu0 %v1429
    %1577 = vmatmul.f32.gmra.mxu0 %v1423
    %v1578 = vpop.f32.mrf.mxu0
    %v1579 = vadd.f32 %v1496, %v1578
    %1580 = vdwg.mxu0
    %v1581 = vxor.u32 %v1519, 2147483648
    %v1582 = vxor.u32 %v1539, 2147483648
    %v1583 = vxor.u32 %v1559, 2147483648
    %v1584 = vmul.f32 %v1581, 1.442695
    %v1585 = vpow.pop %v1584
    %v1586 = vmul.f32 %v1582, 1.442695
    %v1587 = vpow.pop %v1586
    %v1588 = vmul.f32 %v1583, 1.442695
    %v1589 = vpow.pop %v1588
    %v1590 = vadd.f32 %v1585, 1.0
    %v1591 = vadd.f32 %v1587, 1.0
    %v1592 = vadd.f32 %v1589, 1.0
    %v1593 = vrcp.pop %v1590
    %v1594 = vmul.f32 %v1590, %v1593
    %v1595 = vsub.f32 1.0, %v1594
    %v1596 = vmul.f32 %v1593, %v1595
    %v1597 = vadd.f32 %v1593, %v1596
    %vm1598 = vweird.f32 %v1590
    %vm1599 = vweird.f32 %v1593
    %vm1600 = vmor %vm1598, %vm1599
    %v1601 = vsel %vm1600, %v1593, %v1597
    %v1602 = vand.u32 2147483647, %v1590
    %vm1603 = vcmp.eq.f32.partialorder %v1602, 8.507059e+37
    %v1604 = vand.u32 %v1590, 2147483648
    %v1605 = vor.u32 1.1754944e-38, %v1604
    %v1606 = vsel %vm1603, %v1605, %v1601
    %v1607 = vmul.f32 1.0, %v1606
    %v1608 = vrcp.pop %v1591
    %v1609 = vmul.f32 %v1591, %v1608
    %v1610 = vsub.f32 1.0, %v1609
    %v1611 = vmul.f32 %v1608, %v1610
    %v1612 = vadd.f32 %v1608, %v1611
    %vm1613 = vweird.f32 %v1591
    %vm1614 = vweird.f32 %v1608
    %vm1615 = vmor %vm1613, %vm1614
    %v1616 = vsel %vm1615, %v1608, %v1612
    %v1617 = vand.u32 2147483647, %v1591
    %vm1618 = vcmp.eq.f32.partialorder %v1617, 8.507059e+37
    %v1619 = vand.u32 %v1591, 2147483648
    %v1620 = vor.u32 1.1754944e-38, %v1619
    %v1621 = vsel %vm1618, %v1620, %v1616
    %v1622 = vmul.f32 1.0, %v1621
    %v1623 = vrcp.pop %v1592
    %v1624 = vmul.f32 %v1592, %v1623
    %v1625 = vsub.f32 1.0, %v1624
    %v1626 = vmul.f32 %v1623, %v1625
    %v1627 = vadd.f32 %v1623, %v1626
    %vm1628 = vweird.f32 %v1592
    %vm1629 = vweird.f32 %v1623
    %vm1630 = vmor %vm1628, %vm1629
    %v1631 = vsel %vm1630, %v1623, %v1627
    %v1632 = vand.u32 2147483647, %v1592
    %vm1633 = vcmp.eq.f32.partialorder %v1632, 8.507059e+37
    %v1634 = vand.u32 %v1592, 2147483648
    %v1635 = vor.u32 1.1754944e-38, %v1634
    %v1636 = vsel %vm1633, %v1635, %v1631
    %v1637 = vmul.f32 1.0, %v1636
    %v1638 = vtanh.pop %v1579
    %v1639 = vmul.f32 %v1622, %v1424
    %v1640 = vmul.f32 %v1607, %v1638
    %v1641 = vadd.f32 %v1639, %v1640
    %v1642 = vtanh.pop %v1641
    %v1643 = vmul.f32 %v1637, %v1642
    %s1644 = sadd.s32 %s288, 6
    %p1645 = scmp.lt.s32.totalorder %s1644, 1
    %s1646 = scalar_select %p1645, 1, 0
    %v1647 = vstv %s1646
    %vm1648 = vcmp.eq.s32.totalorder %v1647, 1
    %v1649 = vsel %vm1648, %v1643, %v1423
    %v1650 = vsel %vm1648, %v1641, %v1424
    %1651 = vst [vmem:[#allocation9 + $0x6] sm:$0x1] %v1649
    %v1652 = vld [vmem:[#allocation6] sm:$0xff]
    %v1653 = vld [vmem:[#allocation6 + $0x8] sm:$0xff]
    %v1654 = vld [vmem:[#allocation6 + $0x10] sm:$0xff]
    %v1655 = vld [vmem:[#allocation6 + $0x18] sm:$0xff]
    %v1656 = vld [vmem:[#allocation6 + $0x20] sm:$0xff]
    %v1657 = vld [vmem:[#allocation6 + $0x28] sm:$0xff]
    %v1658 = vld [vmem:[#allocation6 + $0x30] sm:$0xff]
    %v1659 = vld [vmem:[#allocation6 + $0x38] sm:$0xff]
    %v1660 = vld [vmem:[#allocation6 + $0x40] sm:$0xff]
    %v1661 = vld [vmem:[#allocation6 + $0x48] sm:$0xff]
    %v1662 = vld [vmem:[#allocation6 + $0x50] sm:$0xff]
    %v1663 = vld [vmem:[#allocation6 + $0x58] sm:$0xff]
    %v1664 = vld [vmem:[#allocation6 + $0x60] sm:$0xff]
    %v1665 = vld [vmem:[#allocation6 + $0x68] sm:$0xff]
    %v1666 = vld [vmem:[#allocation6 + $0x70] sm:$0xff]
    %v1667 = vld [vmem:[#allocation6 + $0x78] sm:$0xff]
    %v1668 = vld [vmem:[#allocation6 + $0x80] sm:$0xff]
    %v1669 = vld [vmem:[#allocation6 + $0x88] sm:$0xff]
    %v1670 = vld [vmem:[#allocation6 + $0x90] sm:$0xff]
    %v1671 = vld [vmem:[#allocation6 + $0x98] sm:$0xff]
    %v1672 = vld [vmem:[#allocation6 + $0xa0] sm:$0xff]
    %v1673 = vld [vmem:[#allocation6 + $0xa8] sm:$0xff]
    %v1674 = vld [vmem:[#allocation6 + $0xb0] sm:$0xff]
    %v1675 = vld [vmem:[#allocation6 + $0xb8] sm:$0xff]
    %v1676 = vld [vmem:[#allocation6 + $0xc0] sm:$0xff]
    %v1677 = vld [vmem:[#allocation6 + $0xc8] sm:$0xff]
    %v1678 = vld [vmem:[#allocation6 + $0xd0] sm:$0xff]
    %v1679 = vld [vmem:[#allocation6 + $0xd8] sm:$0xff]
    %v1680 = vld [vmem:[#allocation6 + $0xe0] sm:$0xff]
    %v1681 = vld [vmem:[#allocation6 + $0xe8] sm:$0xff]
    %v1682 = vld [vmem:[#allocation6 + $0xf0] sm:$0xff]
    %v1683 = vld [vmem:[#allocation6 + $0xf8] sm:$0xff]
    %v1684 = vld [vmem:[#allocation6 + $0x100] sm:$0xff]
    %v1685 = vld [vmem:[#allocation6 + $0x108] sm:$0xff]
    %v1686 = vld [vmem:[#allocation6 + $0x110] sm:$0xff]
    %v1687 = vld [vmem:[#allocation6 + $0x118] sm:$0xff]
    %v1688 = vld [vmem:[#allocation6 + $0x120] sm:$0xff]
    %v1689 = vld [vmem:[#allocation6 + $0x128] sm:$0xff]
    %v1690 = vld [vmem:[#allocation6 + $0x130] sm:$0xff]
    %v1691 = vld [vmem:[#allocation6 + $0x138] sm:$0xff]
    %v1692 = vld [vmem:[#allocation6 + $0x140] sm:$0xff]
    %v1693 = vld [vmem:[#allocation6 + $0x148] sm:$0xff]
    %v1694 = vld [vmem:[#allocation6 + $0x150] sm:$0xff]
    %v1695 = vld [vmem:[#allocation6 + $0x158] sm:$0xff]
    %v1696 = vld [vmem:[#allocation6 + $0x160] sm:$0xff]
    %v1697 = vld [vmem:[#allocation6 + $0x168] sm:$0xff]
    %v1698 = vld [vmem:[#allocation6 + $0x170] sm:$0xff]
    %v1699 = vld [vmem:[#allocation6 + $0x178] sm:$0xff]
    %v1700 = vld [vmem:[#allocation6 + $0x180] sm:$0xff]
    %v1701 = vld [vmem:[#allocation6 + $0x188] sm:$0xff]
    %v1702 = vld [vmem:[#allocation6 + $0x190] sm:$0xff]
    %v1703 = vld [vmem:[#allocation6 + $0x198] sm:$0xff]
    %v1704 = vld [vmem:[#allocation6 + $0x1a0] sm:$0xff]
    %v1705 = vld [vmem:[#allocation6 + $0x1a8] sm:$0xff]
    %v1706 = vld [vmem:[#allocation6 + $0x1b0] sm:$0xff]
    %v1707 = vld [vmem:[#allocation6 + $0x1b8] sm:$0xff]
    %v1708 = vld [vmem:[#allocation6 + $0x1c0] sm:$0xff]
    %v1709 = vld [vmem:[#allocation6 + $0x1c8] sm:$0xff]
    %v1710 = vld [vmem:[#allocation6 + $0x1d0] sm:$0xff]
    %v1711 = vld [vmem:[#allocation6 + $0x1d8] sm:$0xff]
    %v1712 = vld [vmem:[#allocation6 + $0x1e0] sm:$0xff]
    %v1713 = vld [vmem:[#allocation6 + $0x1e8] sm:$0xff]
    %v1714 = vld [vmem:[#allocation6 + $0x1f0] sm:$0xff]
    %v1715 = vld [vmem:[#allocation6 + $0x1f8] sm:$0xff]
    %s1716 = scalar_lea.vmem [#allocation3], 7
    %v1717 = vld [vmem:[%s1716] ss:$8 sm:$0xf]
    %v1719 = vperm.slane %v1717, 0
    %v1720 = vperm.slane %v1717, 1
    %v1721 = vperm.slane %v1717, 2
    %v1722 = vperm.slane %v1717, 3
    %1727 = vmatpush.msra.mxu0 %v1712
    %1728 = vmatpush.msra.mxu0 %v1708
    %1729 = vmatpush.msra.mxu0 %v1704
    %1730 = vmatpush.msra.mxu0 %v1700
    %1731 = vmatpush.msra.mxu0 %v1696
    %1732 = vmatpush.msra.mxu0 %v1692
    %1733 = vmatpush.msra.mxu0 %v1688
    %1734 = vmatpush.msra.mxu0 %v1684
    %1735 = vmatpush.msra.mxu0 %v1680
    %1736 = vmatpush.msra.mxu0 %v1676
    %1737 = vmatpush.msra.mxu0 %v1672
    %1738 = vmatpush.msra.mxu0 %v1668
    %1739 = vmatpush.msra.mxu0 %v1664
    %1740 = vmatpush.msra.mxu0 %v1660
    %1741 = vmatpush.msra.mxu0 %v1656
    %1742 = vmatpush.msra.mxu0 %v1652
    %1743 = vmatmul.f32.gmra.mxu0 %v1649
    %v1744 = vpop.f32.mrf.mxu0
    %v1745 = vadd.f32 %v1719, %v1744
    %1746 = vdwg.mxu0
    %1747 = vmatpush.msra.mxu0 %v1713
    %1748 = vmatpush.msra.mxu0 %v1709
    %1749 = vmatpush.msra.mxu0 %v1705
    %1750 = vmatpush.msra.mxu0 %v1701
    %1751 = vmatpush.msra.mxu0 %v1697
    %1752 = vmatpush.msra.mxu0 %v1693
    %1753 = vmatpush.msra.mxu0 %v1689
    %1754 = vmatpush.msra.mxu0 %v1685
    %1755 = vmatpush.msra.mxu0 %v1681
    %1756 = vmatpush.msra.mxu0 %v1677
    %1757 = vmatpush.msra.mxu0 %v1673
    %1758 = vmatpush.msra.mxu0 %v1669
    %1759 = vmatpush.msra.mxu0 %v1665
    %1760 = vmatpush.msra.mxu0 %v1661
    %1761 = vmatpush.msra.mxu0 %v1657
    %1762 = vmatpush.msra.mxu0 %v1653
    %1763 = vmatmul.f32.gmra.mxu0 %v1649
    %v1764 = vpop.f32.mrf.mxu0
    %v1765 = vadd.f32 %v1720, %v1764
    %1766 = vdwg.mxu0
    %1767 = vmatpush.msra.mxu0 %v1714
    %1768 = vmatpush.msra.mxu0 %v1710
    %1769 = vmatpush.msra.mxu0 %v1706
    %1770 = vmatpush.msra.mxu0 %v1702
    %1771 = vmatpush.msra.mxu0 %v1698
    %1772 = vmatpush.msra.mxu0 %v1694
    %1773 = vmatpush.msra.mxu0 %v1690
    %1774 = vmatpush.msra.mxu0 %v1686
    %1775 = vmatpush.msra.mxu0 %v1682
    %1776 = vmatpush.msra.mxu0 %v1678
    %1777 = vmatpush.msra.mxu0 %v1674
    %1778 = vmatpush.msra.mxu0 %v1670
    %1779 = vmatpush.msra.mxu0 %v1666
    %1780 = vmatpush.msra.mxu0 %v1662
    %1781 = vmatpush.msra.mxu0 %v1658
    %1782 = vmatpush.msra.mxu0 %v1654
    %1783 = vmatmul.f32.gmra.mxu0 %v1649
    %v1784 = vpop.f32.mrf.mxu0
    %v1785 = vadd.f32 %v1721, %v1784
    %1786 = vdwg.mxu0
    %1787 = vmatpush.msra.mxu0 %v1715
    %1788 = vmatpush.msra.mxu0 %v1711
    %1789 = vmatpush.msra.mxu0 %v1707
    %1790 = vmatpush.msra.mxu0 %v1703
    %1791 = vmatpush.msra.mxu0 %v1699
    %1792 = vmatpush.msra.mxu0 %v1695
    %1793 = vmatpush.msra.mxu0 %v1691
    %1794 = vmatpush.msra.mxu0 %v1687
    %1795 = vmatpush.msra.mxu0 %v1683
    %1796 = vmatpush.msra.mxu0 %v1679
    %1797 = vmatpush.msra.mxu0 %v1675
    %1798 = vmatpush.msra.mxu0 %v1671
    %1799 = vmatpush.msra.mxu0 %v1667
    %1800 = vmatpush.msra.mxu0 %v1663
    %1801 = vmatpush.msra.mxu0 %v1659
    %1802 = vmatpush.msra.mxu0 %v1655
    %1803 = vmatmul.f32.gmra.mxu0 %v1649
    %v1804 = vpop.f32.mrf.mxu0
    %v1805 = vadd.f32 %v1722, %v1804
    %1806 = vdwg.mxu0
    %v1807 = vxor.u32 %v1745, 2147483648
    %v1808 = vxor.u32 %v1765, 2147483648
    %v1809 = vxor.u32 %v1785, 2147483648
    %v1810 = vmul.f32 %v1807, 1.442695
    %v1811 = vpow.pop %v1810
    %v1812 = vmul.f32 %v1808, 1.442695
    %v1813 = vpow.pop %v1812
    %v1814 = vmul.f32 %v1809, 1.442695
    %v1815 = vpow.pop %v1814
    %v1816 = vadd.f32 %v1811, 1.0
    %v1817 = vadd.f32 %v1813, 1.0
    %v1818 = vadd.f32 %v1815, 1.0
    %v1819 = vrcp.pop %v1816
    %v1820 = vmul.f32 %v1816, %v1819
    %v1821 = vsub.f32 1.0, %v1820
    %v1822 = vmul.f32 %v1819, %v1821
    %v1823 = vadd.f32 %v1819, %v1822
    %vm1824 = vweird.f32 %v1816
    %vm1825 = vweird.f32 %v1819
    %vm1826 = vmor %vm1824, %vm1825
    %v1827 = vsel %vm1826, %v1819, %v1823
    %v1828 = vand.u32 2147483647, %v1816
    %vm1829 = vcmp.eq.f32.partialorder %v1828, 8.507059e+37
    %v1830 = vand.u32 %v1816, 2147483648
    %v1831 = vor.u32 1.1754944e-38, %v1830
    %v1832 = vsel %vm1829, %v1831, %v1827
    %v1833 = vmul.f32 1.0, %v1832
    %v1834 = vrcp.pop %v1817
    %v1835 = vmul.f32 %v1817, %v1834
    %v1836 = vsub.f32 1.0, %v1835
    %v1837 = vmul.f32 %v1834, %v1836
    %v1838 = vadd.f32 %v1834, %v1837
    %vm1839 = vweird.f32 %v1817
    %vm1840 = vweird.f32 %v1834
    %vm1841 = vmor %vm1839, %vm1840
    %v1842 = vsel %vm1841, %v1834, %v1838
    %v1843 = vand.u32 2147483647, %v1817
    %vm1844 = vcmp.eq.f32.partialorder %v1843, 8.507059e+37
    %v1845 = vand.u32 %v1817, 2147483648
    %v1846 = vor.u32 1.1754944e-38, %v1845
    %v1847 = vsel %vm1844, %v1846, %v1842
    %v1848 = vmul.f32 1.0, %v1847
    %v1849 = vrcp.pop %v1818
    %v1850 = vmul.f32 %v1818, %v1849
    %v1851 = vsub.f32 1.0, %v1850
    %v1852 = vmul.f32 %v1849, %v1851
    %v1853 = vadd.f32 %v1849, %v1852
    %vm1854 = vweird.f32 %v1818
    %vm1855 = vweird.f32 %v1849
    %vm1856 = vmor %vm1854, %vm1855
    %v1857 = vsel %vm1856, %v1849, %v1853
    %v1858 = vand.u32 2147483647, %v1818
    %vm1859 = vcmp.eq.f32.partialorder %v1858, 8.507059e+37
    %v1860 = vand.u32 %v1818, 2147483648
    %v1861 = vor.u32 1.1754944e-38, %v1860
    %v1862 = vsel %vm1859, %v1861, %v1857
    %v1863 = vmul.f32 1.0, %v1862
    %v1864 = vtanh.pop %v1805
    %v1865 = vmul.f32 %v1848, %v1650
    %v1866 = vmul.f32 %v1833, %v1864
    %v1867 = vadd.f32 %v1865, %v1866
    %v1868 = vtanh.pop %v1867
    %v1869 = vmul.f32 %v1863, %v1868
    %s1870 = sadd.s32 %s288, 7
    %p1871 = scmp.lt.s32.totalorder %s1870, 1
    %s1872 = scalar_select %p1871, 1, 0
    %v1873 = vstv %s1872
    %vm1874 = vcmp.eq.s32.totalorder %v1873, 1
    %v1875 = vsel %vm1874, %v1869, %v1649
    %v1876 = vsel %vm1874, %v1867, %v1650
    %1877 = vst [vmem:[#allocation9 + $0x7] sm:$0x1] %v1875
    %1878 = vst [vmem:[#allocation2] sm:$0x1] %v1875
    %1879 = vst [vmem:[#allocation2 + $0x1] sm:$0x1] %v1876
    // Predicated region
    $region30: #{tpu_custom_call.1} parent=1 // pred_check
      %p1880 = pneg %p61
    $region31: #{tpu_custom_call.1} parent=1 // pred_check_branch
      %1882 = sbr.rel (%p1880) target = $region33
    $region32: #{tpu_custom_call.1} parent=1 // pred_region
      %v1883 = vld [vmem:[#allocation2] sm:$0x3]
      %1884 = vst [vmem:[#allocation10] sm:$0x3] %v1883
    $region33: #{tpu_custom_call.1} parent=1 // pred_fallthru
      _
    // Predicated region
    $region34: #{tpu_custom_call.1} parent=1 // pred_check
      _
    $region35: #{tpu_custom_call.1} parent=1 // pred_check_branch
      %1886 = sbr.rel (0) target = $region37
    $region36: #{tpu_custom_call.1} parent=1 // pred_region
      %1888 = vsyncadd [#allocation5], 0
      %s1890 = sshll.u32 [#allocation9], 4
      %s1891 = int_to_ptr.vmem [resolvable:$true] %s1890
      %s1892 = sshll.u32 %s3, 4
      %s1893 = int_to_ptr.hbm [resolvable:$true] %s1892
      %1895 = dma.vmem_to_hbm [thread:$0]  %s1891, 128, %s1893, [#allocation5]
    $region37: #{tpu_custom_call.1} parent=1 // pred_fallthru
      _
    // Predicated region
    $region38: #{tpu_custom_call.1} parent=1 // pred_check
      _
    $region39: #{tpu_custom_call.1} parent=1 // pred_check_branch
      %1897 = sbr.rel (0) target = $region41
    $region40: #{tpu_custom_call.1} parent=1 // pred_region
      %1899 = vsyncadd [#allocation11], 0
      %s1901 = sshll.u32 [#allocation10], 4
      %s1902 = int_to_ptr.vmem [resolvable:$true] %s1901
      %s1903 = sshll.u32 %s4, 4
      %s1904 = int_to_ptr.hbm [resolvable:$true] %s1903
      %1906 = dma.vmem_to_hbm [thread:$0]  %s1902, 32, %s1904, [#allocation11]
    $region41: #{tpu_custom_call.1} parent=1 // pred_fallthru
      _
    // Predicated region
    $region42: #{tpu_custom_call.1} parent=1 // pred_check
      _
    $region43: #{tpu_custom_call.1} parent=1 // pred_check_branch
      %1908 = sbr.rel (0) target = $region45
    $region44: #{tpu_custom_call.1} parent=1 // pred_region
      %1910 = dma.done [#allocation5], 128
    $region45: #{tpu_custom_call.1} parent=1 // pred_fallthru
      _
    // Predicated region
    $region46: #{tpu_custom_call.1} parent=1 // pred_check
      _
    $region47: #{tpu_custom_call.1} parent=1 // pred_check_branch
      %1912 = sbr.rel (0) target = $region49
    $region48: #{tpu_custom_call.1} parent=1 // pred_region
      %1914 = dma.done [#allocation11], 32
    $region49: #{tpu_custom_call.1} parent=1 // pred_fallthru
      _
    %1915 = vsyncpa [#allocation4], 1
    %1916 = vsyncpa [#allocation7], 1
    %1917 = vsyncpa [#allocation5], 1
    %1918 = vsyncpa [#allocation11], 1

</llo_original>
